<compile_context>
chip_gen: v6e
topology: v6e:2x2x1
jax: 0.10.0
libtpu: 0.0.40
codegen_flags: <defaults>
</compile_context>

<pallas_src>
import functools
import math

import jax
import jax.numpy as jnp
from jax.experimental import pallas as pl
from jax.experimental.pallas import tpu as pltpu

_BN_EPS = 1e-5
_VMEM = functools.partial(pl.BlockSpec, memory_space=pltpu.MemorySpace.VMEM)


# --------------------------------------------------------------------------
# In-kernel helpers (static shapes, only sliced loads/stores + one big matmul)
# --------------------------------------------------------------------------
def _reflect_border(dst, p, H, W):
    """Fill the p-wide reflect border of dst (B, H+2p, W+2p, C); center must be
    written already.  PyTorch-style reflection (no edge repeat)."""
    for j in range(p):
        dst[:, p:p + H, j:j + 1, :] = dst[:, p:p + H, 2 * p - j:2 * p - j + 1, :]
        dst[:, p:p + H, W + p + j:W + p + j + 1, :] = (
            dst[:, p:p + H, W + p - 2 - j:W + p - 1 - j, :])
    for i in range(p):
        dst[:, i:i + 1, :, :] = dst[:, 2 * p - i:2 * p - i + 1, :, :]
        dst[:, H + p + i:H + p + i + 1, :, :] = (
            dst[:, H + p - 2 - i:H + p - 1 - i, :, :])


def _im2col(col_ref, xp_ref, kh, kw, H, W, C):
    """col_ref: (B, H, W, kh*kw*C)  <-  xp_ref: (B, H+kh-1, W+kw-1, C)."""
    for dy in range(kh):
        for dx in range(kw):
            t = dy * kw + dx
            col_ref[:, :, :, t * C:(t + 1) * C] = xp_ref[:, dy:dy + H, dx:dx + W, :]


def _mm(a, w):
    """a: (..., K) f32, w: (K, N) bf16 -> (..., N) f32 (bf16 MXU, f32 accumulate)."""
    return jax.lax.dot_general(
        a.astype(w.dtype), w,
        dimension_numbers=(((a.ndim - 1,), (0,)), ((), ())),
        preferred_element_type=jnp.float32)


def _batchnorm(y, gamma, beta, eps):
    """Training-mode BatchNorm2d (biased batch stats), one-pass sum/sumsq."""
    n = y.shape[0] * y.shape[1] * y.shape[2]
    s = jnp.sum(y, axis=(0, 1, 2), keepdims=True)
    ss = jnp.sum(y * y, axis=(0, 1, 2), keepdims=True)
    mean = s * (1.0 / n)
    var = ss * (1.0 / n) - mean * mean
    inv = jax.lax.rsqrt(var + eps)
    return (y - mean) * (inv * gamma) + beta


def _interp_taps(n_in, n_out):
    """Static (lo, frac) taps for 1-D bilinear resize, align_corners=True."""
    if n_in == 1:
        return [(0, 0.0)] * n_out
    taps = []
    for i in range(n_out):
        src = i * (n_in - 1) / (n_out - 1)
        lo = min(int(math.floor(src)), n_in - 2)
        taps.append((lo, src - lo))
    return taps


# --------------------------------------------------------------------------
# Fused resnet block:  reflect-pad -> conv3x3 -> BN -> ReLU -> reflect-pad ->
#                      conv3x3 -> BN -> (+ residual / 1x1 proj) -> ReLU
# Optionally consumes a skip tensor (in-kernel channel concat).
# --------------------------------------------------------------------------
def _make_resnet_kernel(B, H, W, C1, C2, Cout, eps):
    Cin = C1 + C2
    has_skip = C2 > 0
    has_proj = Cin != Cout

    def kernel(*refs):
        it = iter(refs)
        x1_ref = next(it)
        x2_ref = next(it) if has_skip else None
        w1_ref, g1_ref, b1_ref = next(it), next(it), next(it)
        w2_ref, g2_ref, b2_ref = next(it), next(it), next(it)
        wpa_ref = next(it) if has_proj else None
        wpb_ref = next(it) if (has_proj and has_skip) else None
        out_ref = next(it)
        xp1_ref, col1_ref, xp2_ref, col2_ref = next(it), next(it), next(it), next(it)

        x1 = x1_ref[...]
        xp1_ref[:, 1:H + 1, 1:W + 1, 0:C1] = x1          # in-kernel channel concat
        if has_skip:
            x2 = x2_ref[...]
            xp1_ref[:, 1:H + 1, 1:W + 1, C1:Cin] = x2
        _reflect_border(xp1_ref, 1, H, W)
        _im2col(col1_ref, xp1_ref, 3, 3, H, W, Cin)

        h = _mm(col1_ref[...], w1_ref[...])              # (B,H,W,Cout) f32
        h = _batchnorm(h, g1_ref[...], b1_ref[...], eps)
        h = jnp.maximum(h, 0.0)

        xp2_ref[:, 1:H + 1, 1:W + 1, :] = h
        _reflect_border(xp2_ref, 1, H, W)
        _im2col(col2_ref, xp2_ref, 3, 3, H, W, Cout)
        y = _mm(col2_ref[...], w2_ref[...])
        y = _batchnorm(y, g2_ref[...], b2_ref[...], eps)

        if has_proj:
            res = _mm(x1, wpa_ref[...])
            if has_skip:
                res = res + _mm(x2, wpb_ref[...])
        else:
            res = x1
        y = y + res
        out_ref[...] = jnp.maximum(y, 0.0).astype(out_ref.dtype)

    return kernel


def fused_resnet_block(x, p, skip=None, *, eps=_BN_EPS):
    B, H, W, C1 = x.shape
    C2 = 0 if skip is None else skip.shape[-1]
    Cin = C1 + C2
    Cout = p["w1"].shape[-1]
    if skip is not None and Cin == Cout:
        # TODO(synk): unreachable in DecoderV7 (skip concat always doubles channels).
        x = jnp.concatenate([x, skip], axis=-1)
        skip, C1, C2 = None, Cin, 0
    has_skip = skip is not None
    has_proj = Cin != Cout

    w1 = p["w1"].reshape(9 * Cin, Cout).astype(jnp.bfloat16)
    w2 = p["w2"].reshape(9 * Cout, Cout).astype(jnp.bfloat16)
    g1 = p["g1"].reshape(1, Cout).astype(jnp.float32)
    b1 = p["b1"].reshape(1, Cout).astype(jnp.float32)
    g2 = p["g2"].reshape(1, Cout).astype(jnp.float32)
    b2 = p["b2"].reshape(1, Cout).astype(jnp.float32)

    inputs = [x]
    if has_skip:
        inputs.append(skip)
    inputs += [w1, g1, b1, w2, g2, b2]
    if has_proj:
        wp = p["wproj"].reshape(Cin, Cout).astype(jnp.bfloat16)
        inputs.append(wp[:C1])
        if has_skip:
            inputs.append(wp[C1:])

    scratch = [
        pltpu.VMEM((B, H + 2, W + 2, Cin), jnp.float32),
        pltpu.VMEM((B, H, W, 9 * Cin), jnp.float32),
        pltpu.VMEM((B, H + 2, W + 2, Cout), jnp.float32),
        pltpu.VMEM((B, H, W, 9 * Cout), jnp.float32),
    ]
    return pl.pallas_call(
        _make_resnet_kernel(B, H, W, C1, C2, Cout, eps),
        out_shape=jax.ShapeDtypeStruct((B, H, W, Cout), jnp.float32),
        in_specs=[_VMEM() for _ in inputs],
        out_specs=_VMEM(),
        scratch_shapes=scratch,
    )(*inputs)


# --------------------------------------------------------------------------
# Fused upconv:  bilinear 2x (align_corners=True, separable) -> reflect-pad ->
#                conv3x3 (no bias) -> BN -> ReLU
# --------------------------------------------------------------------------
def _make_upconv_kernel(B, H, W, Cin, Cout, h_taps, w_taps, eps):
    Ho, Wo = 2 * H, 2 * W

    def kernel(x_ref, w_ref, g_ref, b_ref, out_ref, up_ref, xp_ref, col_ref):
        x = x_ref[...]                                   # (B,H,W,Cin) f32
        # --- H pass (static taps, weighted adds) ---
        for ho, (lo, f) in enumerate(h_taps):
            if f == 0.0:
                r = x[:, lo:lo + 1, :, :]
            else:
                r = (1.0 - f) * x[:, lo:lo + 1, :, :] + f * x[:, lo + 1:lo + 2, :, :]
            up_ref[:, ho:ho + 1, :, :] = r
        u = up_ref[...]                                  # (B,Ho,W,Cin)
        # --- W pass, written straight into the padded conv input ---
        for wo, (lo, f) in enumerate(w_taps):
            if f == 0.0:
                c = u[:, :, lo:lo + 1, :]
            else:
                c = (1.0 - f) * u[:, :, lo:lo + 1, :] + f * u[:, :, lo + 1:lo + 2, :]
            xp_ref[:, 1:Ho + 1, 1 + wo:2 + wo, :] = c
        _reflect_border(xp_ref, 1, Ho, Wo)

        _im2col(col_ref, xp_ref, 3, 3, Ho, Wo, Cin)
        y = _mm(col_ref[...], w_ref[...])                # (B,Ho,Wo,Cout) f32
        y = _batchnorm(y, g_ref[...], b_ref[...], eps)
        out_ref[...] = jnp.maximum(y, 0.0).astype(out_ref.dtype)

    return kernel


def fused_upconv(x, p, *, eps=_BN_EPS):
    B, H, W, Cin = x.shape
    Cout = p["w"].shape[-1]
    Ho, Wo = 2 * H, 2 * W
    w = p["w"].reshape(9 * Cin, Cout).astype(jnp.bfloat16)
    g = p["g"].reshape(1, Cout).astype(jnp.float32)
    b = p["b"].reshape(1, Cout).astype(jnp.float32)
    scratch = [
        pltpu.VMEM((B, Ho, W, Cin), jnp.float32),
        pltpu.VMEM((B, Ho + 2, Wo + 2, Cin), jnp.float32),
        pltpu.VMEM((B, Ho, Wo, 9 * Cin), jnp.float32),
    ]
    return pl.pallas_call(
        _make_upconv_kernel(B, H, W, Cin, Cout,
                            _interp_taps(H, Ho), _interp_taps(W, Wo), eps),
        out_shape=jax.ShapeDtypeStruct((B, Ho, Wo, Cout), jnp.float32),
        in_specs=[_VMEM() for _ in range(4)],
        out_specs=_VMEM(),
        scratch_shapes=scratch,
    )(x, w, g, b)


# --------------------------------------------------------------------------
# Fused final:  ReflectionPad2d(3) -> Conv7x7 (+bias) -> Sigmoid
# --------------------------------------------------------------------------
def _make_final_kernel(B, H, W, Cin, Cout):
    def kernel(x_ref, w_ref, b_ref, out_ref, xp_ref, col_ref):
        xp_ref[:, 3:H + 3, 3:W + 3, :] = x_ref[...]
        _reflect_border(xp_ref, 3, H, W)
        _im2col(col_ref, xp_ref, 7, 7, H, W, Cin)
        y = _mm(col_ref[...], w_ref[...]) + b_ref[...]
        out_ref[...] = (1.0 / (1.0 + jnp.exp(-y))).astype(out_ref.dtype)
    return kernel


def fused_final(x, p):
    B, H, W, Cin = x.shape
    Cout = p["w"].shape[-1]
    w = p["w"].reshape(49 * Cin, Cout).astype(jnp.bfloat16)
    b = p["b"].reshape(1, Cout).astype(jnp.float32)
    scratch = [
        pltpu.VMEM((B, H + 6, W + 6, Cin), jnp.float32),
        pltpu.VMEM((B, H, W, 49 * Cin), jnp.float32),
    ]
    return pl.pallas_call(
        _make_final_kernel(B, H, W, Cin, Cout),
        out_shape=jax.ShapeDtypeStruct((B, H, W, Cout), jnp.float32),
        in_specs=[_VMEM() for _ in range(3)],
        out_specs=_VMEM(),
        scratch_shapes=scratch,
    )(x, w, b)


# --------------------------------------------------------------------------
# Decoder forward (NCHW module boundary, NHWC kernels)
# --------------------------------------------------------------------------
def decoder_v7_forward(encoded_observations_nchw, params):
    feats = [jnp.transpose(t, (0, 2, 3, 1)).astype(jnp.float32)
             for t in encoded_observations_nchw]
    cur = feats[-1]
    skip = None
    blocks = params["blocks"]
    for i, layers in enumerate(blocks):
        for kind, p in layers:
            if kind == "resnet":
                cur = fused_resnet_block(cur, p, skip=skip)
                skip = None
            else:
                if skip is not None:   # only if a block starts with an upconv
                    cur = jnp.concatenate([cur, skip], axis=-1)
                    skip = None
                cur = fused_upconv(cur, p)
        if i != len(blocks) - 1:
            skip = feats[-i - 2]       # torch.cat([cur, skip], dim=-3), fused in-kernel
    out = fused_final(cur, params["final"])
    return jnp.transpose(out, (0, 3, 1, 2))               # back to NCHW


# --------------------------------------------------------------------------
# Deterministic parameter construction (mirrors DecoderV7.__init__)
# --------------------------------------------------------------------------
def build_params(model_config, key):
    in_features = model_config["input_features"]
    bottleneck_features = model_config["bottleneck_features"]
    bottleneck_blocks = model_config["bottleneck_blocks"]
    dls = model_config["downsampling_layers_count"]
    initial = bottleneck_features // 2 ** sum(dls)
    mult = 2 ** sum(dls)

    keys = iter(jax.random.split(key, 512))

    def conv_w(kh, kw, cin, cout):
        return 0.1 * jax.random.normal(next(keys), (kh, kw, cin, cout), jnp.float32)

    def resnet_params(dim, out_dim):
        p = {"w1": conv_w(3, 3, dim, out_dim),
             "g1": jnp.ones((out_dim,), jnp.float32),
             "b1": jnp.zeros((out_dim,), jnp.float32),
             "w2": conv_w(3, 3, out_dim, out_dim),
             "g2": jnp.ones((out_dim,), jnp.float32),
             "b2": jnp.zeros((out_dim,), jnp.float32)}
        if dim != out_dim:
            p["wproj"] = conv_w(1, 1, dim, out_dim)
        return p

    blocks = []
    for set_idx, cnt in enumerate(reversed(dls)):
        layers = []
        for i in range(bottleneck_blocks):
            m_in = 2 if (i == 0 and set_idx > 0) else 1
            layers.append(("resnet",
                           resnet_params(initial * mult * m_in, initial * mult)))
        for i in range(cnt):
            if cnt >= 3 and i == cnt - 2:
                for _ in range(bottleneck_blocks):
                    layers.append(("resnet",
                                   resnet_params(initial * mult, initial * mult)))
            layers.append(("upconv",
                           {"w": conv_w(3, 3, initial * mult, initial * mult // 2),
                            "g": jnp.ones((initial * mult // 2,), jnp.float32),
                            "b": jnp.zeros((initial * mult // 2,), jnp.float32)}))
            mult //= 2
        blocks.append(layers)

    final = {"w": conv_w(7, 7, initial, in_features),
             "b": 0.01 * jax.random.normal(next(keys), (in_features,), jnp.float32)}
    return {"blocks": blocks, "final": final}


# --------------------------------------------------------------------------
if __name__ == "__main__":
    model_config = dict(input_features=3,
                        bottleneck_features=32,
                        bottleneck_blocks=1,
                        downsampling_layers_count=[1, 1])

    key = jax.random.PRNGKey(0)
    kp, k_skip, k_bn = jax.random.split(key, 3)
    params = build_params(model_config, kp)

    B = 2
    # encoded_observations (NCHW): [skip @ 8x8 with 16 ch, bottleneck @ 4x4 with 32 ch]
    skip_feats = jax.random.normal(k_skip, (B, 16, 8, 8), jnp.float32)
    bottleneck = jax.random.normal(k_bn, (B, 32, 4, 4), jnp.float32)
    encoded_observations = [skip_feats, bottleneck]

    out = decoder_v7_forward(encoded_observations, params)
    out = jax.block_until_ready(out)
    assert out.shape == (B, 3, 16, 16), out.shape
    assert bool(jnp.all(jnp.isfinite(out)))
    print("KERNEL_OK")
</pallas_src>

<mosaic_0001>
module attributes {stable_mosaic.version = 11 : i64} {
  func.func @kernel(%arg0: memref<2x4x4x32xf32, #tpu.memory_space<vmem>>, %arg1: memref<288x32xbf16, #tpu.memory_space<vmem>>, %arg2: memref<1x32xf32, #tpu.memory_space<vmem>>, %arg3: memref<1x32xf32, #tpu.memory_space<vmem>>, %arg4: memref<288x32xbf16, #tpu.memory_space<vmem>>, %arg5: memref<1x32xf32, #tpu.memory_space<vmem>>, %arg6: memref<1x32xf32, #tpu.memory_space<vmem>>, %arg7: memref<2x4x4x32xf32, #tpu.memory_space<vmem>>, %arg8: memref<2x6x6x32xf32, #tpu.memory_space<vmem>>, %arg9: memref<2x4x4x288xf32, #tpu.memory_space<vmem>>, %arg10: memref<2x6x6x32xf32, #tpu.memory_space<vmem>>, %arg11: memref<2x4x4x288xf32, #tpu.memory_space<vmem>>) attributes {dimension_semantics = [], scalar_prefetch = 0 : i64, scratch_operands = 4 : i64, tpu.core_type = #tpu.core_type<tc>} {
    %c0 = arith.constant 0 : index
    %c0_0 = arith.constant 0 : index
    %c0_1 = arith.constant 0 : index
    %c0_2 = arith.constant 0 : index
    %0 = vector.load %arg0[%c0, %c0_0, %c0_1, %c0_2] : memref<2x4x4x32xf32, #tpu.memory_space<vmem>>, vector<2x4x4x32xf32>
    %c0_3 = arith.constant 0 : index
    %c1 = arith.constant 1 : index
    %c1_4 = arith.constant 1 : index
    %c0_5 = arith.constant 0 : index
    %1 = vector.load %arg8[%c0_3, %c1, %c1_4, %c0_5] : memref<2x6x6x32xf32, #tpu.memory_space<vmem>>, vector<2x4x4x32xf32>
    tpu.vector_store %arg8[%c0_3, %c1, %c1_4, %c0_5], %0 {strides = array<i32>} : memref<2x6x6x32xf32, #tpu.memory_space<vmem>>, vector<2x4x4x32xf32>,
    %c0_6 = arith.constant 0 : index
    %c1_7 = arith.constant 1 : index
    %c2 = arith.constant 2 : index
    %c0_8 = arith.constant 0 : index
    %2 = vector.load %arg8[%c0_6, %c1_7, %c2, %c0_8] : memref<2x6x6x32xf32, #tpu.memory_space<vmem>>, vector<2x4x1x32xf32>
    %c0_9 = arith.constant 0 : index
    %c1_10 = arith.constant 1 : index
    %c0_11 = arith.constant 0 : index
    %c0_12 = arith.constant 0 : index
    %3 = vector.load %arg8[%c0_9, %c1_10, %c0_11, %c0_12] : memref<2x6x6x32xf32, #tpu.memory_space<vmem>>, vector<2x4x1x32xf32>
    tpu.vector_store %arg8[%c0_9, %c1_10, %c0_11, %c0_12], %2 {strides = array<i32>} : memref<2x6x6x32xf32, #tpu.memory_space<vmem>>, vector<2x4x1x32xf32>,
    %c0_13 = arith.constant 0 : index
    %c1_14 = arith.constant 1 : index
    %c3 = arith.constant 3 : index
    %c0_15 = arith.constant 0 : index
    %4 = vector.load %arg8[%c0_13, %c1_14, %c3, %c0_15] : memref<2x6x6x32xf32, #tpu.memory_space<vmem>>, vector<2x4x1x32xf32>
    %c0_16 = arith.constant 0 : index
    %c1_17 = arith.constant 1 : index
    %c5 = arith.constant 5 : index
    %c0_18 = arith.constant 0 : index
    %5 = vector.load %arg8[%c0_16, %c1_17, %c5, %c0_18] : memref<2x6x6x32xf32, #tpu.memory_space<vmem>>, vector<2x4x1x32xf32>
    tpu.vector_store %arg8[%c0_16, %c1_17, %c5, %c0_18], %4 {strides = array<i32>} : memref<2x6x6x32xf32, #tpu.memory_space<vmem>>, vector<2x4x1x32xf32>,
    %c0_19 = arith.constant 0 : index
    %c2_20 = arith.constant 2 : index
    %c0_21 = arith.constant 0 : index
    %c0_22 = arith.constant 0 : index
    %6 = vector.load %arg8[%c0_19, %c2_20, %c0_21, %c0_22] : memref<2x6x6x32xf32, #tpu.memory_space<vmem>>, vector<2x1x6x32xf32>
    %c0_23 = arith.constant 0 : index
    %c0_24 = arith.constant 0 : index
    %c0_25 = arith.constant 0 : index
    %c0_26 = arith.constant 0 : index
    %7 = vector.load %arg8[%c0_23, %c0_24, %c0_25, %c0_26] : memref<2x6x6x32xf32, #tpu.memory_space<vmem>>, vector<2x1x6x32xf32>
    tpu.vector_store %arg8[%c0_23, %c0_24, %c0_25, %c0_26], %6 {strides = array<i32>} : memref<2x6x6x32xf32, #tpu.memory_space<vmem>>, vector<2x1x6x32xf32>,
    %c0_27 = arith.constant 0 : index
    %c3_28 = arith.constant 3 : index
    %c0_29 = arith.constant 0 : index
    %c0_30 = arith.constant 0 : index
    %8 = vector.load %arg8[%c0_27, %c3_28, %c0_29, %c0_30] : memref<2x6x6x32xf32, #tpu.memory_space<vmem>>, vector<2x1x6x32xf32>
    %c0_31 = arith.constant 0 : index
    %c5_32 = arith.constant 5 : index
    %c0_33 = arith.constant 0 : index
    %c0_34 = arith.constant 0 : index
    %9 = vector.load %arg8[%c0_31, %c5_32, %c0_33, %c0_34] : memref<2x6x6x32xf32, #tpu.memory_space<vmem>>, vector<2x1x6x32xf32>
    tpu.vector_store %arg8[%c0_31, %c5_32, %c0_33, %c0_34], %8 {strides = array<i32>} : memref<2x6x6x32xf32, #tpu.memory_space<vmem>>, vector<2x1x6x32xf32>,
    %c0_35 = arith.constant 0 : index
    %c0_36 = arith.constant 0 : index
    %c0_37 = arith.constant 0 : index
    %c0_38 = arith.constant 0 : index
    %10 = vector.load %arg8[%c0_35, %c0_36, %c0_37, %c0_38] : memref<2x6x6x32xf32, #tpu.memory_space<vmem>>, vector<2x4x4x32xf32>
    %c0_39 = arith.constant 0 : index
    %c0_40 = arith.constant 0 : index
    %c0_41 = arith.constant 0 : index
    %c0_42 = arith.constant 0 : index
    %11 = vector.load %arg9[%c0_39, %c0_40, %c0_41, %c0_42] : memref<2x4x4x288xf32, #tpu.memory_space<vmem>>, vector<2x4x4x32xf32>
    tpu.vector_store %arg9[%c0_39, %c0_40, %c0_41, %c0_42], %10 {strides = array<i32>} : memref<2x4x4x288xf32, #tpu.memory_space<vmem>>, vector<2x4x4x32xf32>,
    %c0_43 = arith.constant 0 : index
    %c0_44 = arith.constant 0 : index
    %c1_45 = arith.constant 1 : index
    %c0_46 = arith.constant 0 : index
    %12 = vector.load %arg8[%c0_43, %c0_44, %c1_45, %c0_46] : memref<2x6x6x32xf32, #tpu.memory_space<vmem>>, vector<2x4x4x32xf32>
    %c0_47 = arith.constant 0 : index
    %c0_48 = arith.constant 0 : index
    %c0_49 = arith.constant 0 : index
    %c32 = arith.constant 32 : index
    %13 = vector.load %arg9[%c0_47, %c0_48, %c0_49, %c32] : memref<2x4x4x288xf32, #tpu.memory_space<vmem>>, vector<2x4x4x32xf32>
    tpu.vector_store %arg9[%c0_47, %c0_48, %c0_49, %c32], %12 {strides = array<i32>} : memref<2x4x4x288xf32, #tpu.memory_space<vmem>>, vector<2x4x4x32xf32>,
    %c0_50 = arith.constant 0 : index
    %c0_51 = arith.constant 0 : index
    %c2_52 = arith.constant 2 : index
    %c0_53 = arith.constant 0 : index
    %14 = vector.load %arg8[%c0_50, %c0_51, %c2_52, %c0_53] : memref<2x6x6x32xf32, #tpu.memory_space<vmem>>, vector<2x4x4x32xf32>
    %c0_54 = arith.constant 0 : index
    %c0_55 = arith.constant 0 : index
    %c0_56 = arith.constant 0 : index
    %c64 = arith.constant 64 : index
    %15 = vector.load %arg9[%c0_54, %c0_55, %c0_56, %c64] : memref<2x4x4x288xf32, #tpu.memory_space<vmem>>, vector<2x4x4x32xf32>
    tpu.vector_store %arg9[%c0_54, %c0_55, %c0_56, %c64], %14 {strides = array<i32>} : memref<2x4x4x288xf32, #tpu.memory_space<vmem>>, vector<2x4x4x32xf32>,
    %c0_57 = arith.constant 0 : index
    %c1_58 = arith.constant 1 : index
    %c0_59 = arith.constant 0 : index
    %c0_60 = arith.constant 0 : index
    %16 = vector.load %arg8[%c0_57, %c1_58, %c0_59, %c0_60] : memref<2x6x6x32xf32, #tpu.memory_space<vmem>>, vector<2x4x4x32xf32>
    %c0_61 = arith.constant 0 : index
    %c0_62 = arith.constant 0 : index
    %c0_63 = arith.constant 0 : index
    %c96 = arith.constant 96 : index
    %17 = vector.load %arg9[%c0_61, %c0_62, %c0_63, %c96] : memref<2x4x4x288xf32, #tpu.memory_space<vmem>>, vector<2x4x4x32xf32>
    tpu.vector_store %arg9[%c0_61, %c0_62, %c0_63, %c96], %16 {strides = array<i32>} : memref<2x4x4x288xf32, #tpu.memory_space<vmem>>, vector<2x4x4x32xf32>,
    %c0_64 = arith.constant 0 : index
    %c1_65 = arith.constant 1 : index
    %c1_66 = arith.constant 1 : index
    %c0_67 = arith.constant 0 : index
    %18 = vector.load %arg8[%c0_64, %c1_65, %c1_66, %c0_67] : memref<2x6x6x32xf32, #tpu.memory_space<vmem>>, vector<2x4x4x32xf32>
    %c0_68 = arith.constant 0 : index
    %c0_69 = arith.constant 0 : index
    %c0_70 = arith.constant 0 : index
    %c128 = arith.constant 128 : index
    %19 = vector.load %arg9[%c0_68, %c0_69, %c0_70, %c128] : memref<2x4x4x288xf32, #tpu.memory_space<vmem>>, vector<2x4x4x32xf32>
    tpu.vector_store %arg9[%c0_68, %c0_69, %c0_70, %c128], %18 {strides = array<i32>} : memref<2x4x4x288xf32, #tpu.memory_space<vmem>>, vector<2x4x4x32xf32>,
    %c0_71 = arith.constant 0 : index
    %c1_72 = arith.constant 1 : index
    %c2_73 = arith.constant 2 : index
    %c0_74 = arith.constant 0 : index
    %20 = vector.load %arg8[%c0_71, %c1_72, %c2_73, %c0_74] : memref<2x6x6x32xf32, #tpu.memory_space<vmem>>, vector<2x4x4x32xf32>
    %c0_75 = arith.constant 0 : index
    %c0_76 = arith.constant 0 : index
    %c0_77 = arith.constant 0 : index
    %c160 = arith.constant 160 : index
    %21 = vector.load %arg9[%c0_75, %c0_76, %c0_77, %c160] : memref<2x4x4x288xf32, #tpu.memory_space<vmem>>, vector<2x4x4x32xf32>
    tpu.vector_store %arg9[%c0_75, %c0_76, %c0_77, %c160], %20 {strides = array<i32>} : memref<2x4x4x288xf32, #tpu.memory_space<vmem>>, vector<2x4x4x32xf32>,
    %c0_78 = arith.constant 0 : index
    %c2_79 = arith.constant 2 : index
    %c0_80 = arith.constant 0 : index
    %c0_81 = arith.constant 0 : index
    %22 = vector.load %arg8[%c0_78, %c2_79, %c0_80, %c0_81] : memref<2x6x6x32xf32, #tpu.memory_space<vmem>>, vector<2x4x4x32xf32>
    %c0_82 = arith.constant 0 : index
    %c0_83 = arith.constant 0 : index
    %c0_84 = arith.constant 0 : index
    %c192 = arith.constant 192 : index
    %23 = vector.load %arg9[%c0_82, %c0_83, %c0_84, %c192] : memref<2x4x4x288xf32, #tpu.memory_space<vmem>>, vector<2x4x4x32xf32>
    tpu.vector_store %arg9[%c0_82, %c0_83, %c0_84, %c192], %22 {strides = array<i32>} : memref<2x4x4x288xf32, #tpu.memory_space<vmem>>, vector<2x4x4x32xf32>,
    %c0_85 = arith.constant 0 : index
    %c2_86 = arith.constant 2 : index
    %c1_87 = arith.constant 1 : index
    %c0_88 = arith.constant 0 : index
    %24 = vector.load %arg8[%c0_85, %c2_86, %c1_87, %c0_88] : memref<2x6x6x32xf32, #tpu.memory_space<vmem>>, vector<2x4x4x32xf32>
    %c0_89 = arith.constant 0 : index
    %c0_90 = arith.constant 0 : index
    %c0_91 = arith.constant 0 : index
    %c224 = arith.constant 224 : index
    %25 = vector.load %arg9[%c0_89, %c0_90, %c0_91, %c224] : memref<2x4x4x288xf32, #tpu.memory_space<vmem>>, vector<2x4x4x32xf32>
    tpu.vector_store %arg9[%c0_89, %c0_90, %c0_91, %c224], %24 {strides = array<i32>} : memref<2x4x4x288xf32, #tpu.memory_space<vmem>>, vector<2x4x4x32xf32>,
    %c0_92 = arith.constant 0 : index
    %c2_93 = arith.constant 2 : index
    %c2_94 = arith.constant 2 : index
    %c0_95 = arith.constant 0 : index
    %26 = vector.load %arg8[%c0_92, %c2_93, %c2_94, %c0_95] : memref<2x6x6x32xf32, #tpu.memory_space<vmem>>, vector<2x4x4x32xf32>
    %c0_96 = arith.constant 0 : index
    %c0_97 = arith.constant 0 : index
    %c0_98 = arith.constant 0 : index
    %c256 = arith.constant 256 : index
    %27 = vector.load %arg9[%c0_96, %c0_97, %c0_98, %c256] : memref<2x4x4x288xf32, #tpu.memory_space<vmem>>, vector<2x4x4x32xf32>
    tpu.vector_store %arg9[%c0_96, %c0_97, %c0_98, %c256], %26 {strides = array<i32>} : memref<2x4x4x288xf32, #tpu.memory_space<vmem>>, vector<2x4x4x32xf32>,
    %c0_99 = arith.constant 0 : index
    %c0_100 = arith.constant 0 : index
    %c0_101 = arith.constant 0 : index
    %c0_102 = arith.constant 0 : index
    %28 = vector.load %arg9[%c0_99, %c0_100, %c0_101, %c0_102] : memref<2x4x4x288xf32, #tpu.memory_space<vmem>>, vector<2x4x4x288xf32>
    %c0_103 = arith.constant 0 : index
    %c0_104 = arith.constant 0 : index
    %29 = vector.load %arg1[%c0_103, %c0_104] : memref<288x32xbf16, #tpu.memory_space<vmem>>, vector<288x32xbf16>
    %30 = arith.truncf %28 : vector<2x4x4x288xf32> to vector<2x4x4x288xbf16>
    %cst = arith.constant dense<0.000000e+00> : vector<2x4x4x32xf32>
    %31 = tpu.matmul %30, %29, %cst {dimension_numbers = #tpu.dot_dimension_numbers<[3], [0], [0, 1, 2], [1], [0, 0, 0, 1, 0, 2, 1, 1], [], []>} : vector<2x4x4x288xbf16>, vector<288x32xbf16>, vector<2x4x4x32xf32> -> vector<2x4x4x32xf32>
    %c0_105 = arith.constant 0 : index
    %c0_106 = arith.constant 0 : index
    %32 = vector.load %arg2[%c0_105, %c0_106] : memref<1x32xf32, #tpu.memory_space<vmem>>, vector<1x32xf32>
    %c0_107 = arith.constant 0 : index
    %c0_108 = arith.constant 0 : index
    %33 = vector.load %arg3[%c0_107, %c0_108] : memref<1x32xf32, #tpu.memory_space<vmem>>, vector<1x32xf32>
    %cst_109 = arith.constant dense<0.000000e+00> : vector<32xf32>
    %34 = vector.multi_reduction <add>, %31, %cst_109 [0, 1, 2] : vector<2x4x4x32xf32> to vector<32xf32>
    %35 = vector.shape_cast %34 : vector<32xf32> to vector<1x1x1x32xf32>
    %36 = arith.mulf %31, %31 : vector<2x4x4x32xf32>
    %cst_110 = arith.constant dense<0.000000e+00> : vector<32xf32>
    %37 = vector.multi_reduction <add>, %36, %cst_110 [0, 1, 2] : vector<2x4x4x32xf32> to vector<32xf32>
    %38 = vector.shape_cast %37 : vector<32xf32> to vector<1x1x1x32xf32>
    %cst_111 = arith.constant 3.125000e-02 : f32
    %39 = vector.broadcast %cst_111 : f32 to vector<1x1x1x32xf32>
    %40 = arith.mulf %35, %39 : vector<1x1x1x32xf32>
    %cst_112 = arith.constant 3.125000e-02 : f32
    %41 = vector.broadcast %cst_112 : f32 to vector<1x1x1x32xf32>
    %42 = arith.mulf %38, %41 : vector<1x1x1x32xf32>
    %43 = arith.mulf %40, %40 : vector<1x1x1x32xf32>
    %44 = arith.subf %42, %43 : vector<1x1x1x32xf32>
    %cst_113 = arith.constant 9.99999974E-6 : f32
    %45 = vector.broadcast %cst_113 : f32 to vector<1x1x1x32xf32>
    %46 = arith.addf %44, %45 : vector<1x1x1x32xf32>
    %47 = math.rsqrt %46 : vector<1x1x1x32xf32>
    %48 = vector.broadcast %40 : vector<1x1x1x32xf32> to vector<2x4x4x32xf32>
    %49 = arith.subf %31, %48 : vector<2x4x4x32xf32>
    %50 = vector.shape_cast %32 : vector<1x32xf32> to vector<1x1x1x32xf32>
    %51 = arith.mulf %47, %50 : vector<1x1x1x32xf32>
    %52 = vector.broadcast %51 : vector<1x1x1x32xf32> to vector<2x4x4x32xf32>
    %53 = arith.mulf %49, %52 : vector<2x4x4x32xf32>
    %54 = vector.shape_cast %33 : vector<1x32xf32> to vector<1x1x1x32xf32>
    %55 = vector.broadcast %54 : vector<1x1x1x32xf32> to vector<2x4x4x32xf32>
    %56 = arith.addf %53, %55 : vector<2x4x4x32xf32>
    %cst_114 = arith.constant 0.000000e+00 : f32
    %57 = vector.broadcast %cst_114 : f32 to vector<2x4x4x32xf32>
    %58 = arith.maximumf %56, %57 : vector<2x4x4x32xf32>
    %c0_115 = arith.constant 0 : index
    %c1_116 = arith.constant 1 : index
    %c1_117 = arith.constant 1 : index
    %c0_118 = arith.constant 0 : index
    %59 = vector.load %arg10[%c0_115, %c1_116, %c1_117, %c0_118] : memref<2x6x6x32xf32, #tpu.memory_space<vmem>>, vector<2x4x4x32xf32>
    tpu.vector_store %arg10[%c0_115, %c1_116, %c1_117, %c0_118], %58 {strides = array<i32>} : memref<2x6x6x32xf32, #tpu.memory_space<vmem>>, vector<2x4x4x32xf32>,
    %c0_119 = arith.constant 0 : index
    %c1_120 = arith.constant 1 : index
    %c2_121 = arith.constant 2 : index
    %c0_122 = arith.constant 0 : index
    %60 = vector.load %arg10[%c0_119, %c1_120, %c2_121, %c0_122] : memref<2x6x6x32xf32, #tpu.memory_space<vmem>>, vector<2x4x1x32xf32>
    %c0_123 = arith.constant 0 : index
    %c1_124 = arith.constant 1 : index
    %c0_125 = arith.constant 0 : index
    %c0_126 = arith.constant 0 : index
    %61 = vector.load %arg10[%c0_123, %c1_124, %c0_125, %c0_126] : memref<2x6x6x32xf32, #tpu.memory_space<vmem>>, vector<2x4x1x32xf32>
    tpu.vector_store %arg10[%c0_123, %c1_124, %c0_125, %c0_126], %60 {strides = array<i32>} : memref<2x6x6x32xf32, #tpu.memory_space<vmem>>, vector<2x4x1x32xf32>,
    %c0_127 = arith.constant 0 : index
    %c1_128 = arith.constant 1 : index
    %c3_129 = arith.constant 3 : index
    %c0_130 = arith.constant 0 : index
    %62 = vector.load %arg10[%c0_127, %c1_128, %c3_129, %c0_130] : memref<2x6x6x32xf32, #tpu.memory_space<vmem>>, vector<2x4x1x32xf32>
    %c0_131 = arith.constant 0 : index
    %c1_132 = arith.constant 1 : index
    %c5_133 = arith.constant 5 : index
    %c0_134 = arith.constant 0 : index
    %63 = vector.load %arg10[%c0_131, %c1_132, %c5_133, %c0_134] : memref<2x6x6x32xf32, #tpu.memory_space<vmem>>, vector<2x4x1x32xf32>
    tpu.vector_store %arg10[%c0_131, %c1_132, %c5_133, %c0_134], %62 {strides = array<i32>} : memref<2x6x6x32xf32, #tpu.memory_space<vmem>>, vector<2x4x1x32xf32>,
    %c0_135 = arith.constant 0 : index
    %c2_136 = arith.constant 2 : index
    %c0_137 = arith.constant 0 : index
    %c0_138 = arith.constant 0 : index
    %64 = vector.load %arg10[%c0_135, %c2_136, %c0_137, %c0_138] : memref<2x6x6x32xf32, #tpu.memory_space<vmem>>, vector<2x1x6x32xf32>
    %c0_139 = arith.constant 0 : index
    %c0_140 = arith.constant 0 : index
    %c0_141 = arith.constant 0 : index
    %c0_142 = arith.constant 0 : index
    %65 = vector.load %arg10[%c0_139, %c0_140, %c0_141, %c0_142] : memref<2x6x6x32xf32, #tpu.memory_space<vmem>>, vector<2x1x6x32xf32>
    tpu.vector_store %arg10[%c0_139, %c0_140, %c0_141, %c0_142], %64 {strides = array<i32>} : memref<2x6x6x32xf32, #tpu.memory_space<vmem>>, vector<2x1x6x32xf32>,
    %c0_143 = arith.constant 0 : index
    %c3_144 = arith.constant 3 : index
    %c0_145 = arith.constant 0 : index
    %c0_146 = arith.constant 0 : index
    %66 = vector.load %arg10[%c0_143, %c3_144, %c0_145, %c0_146] : memref<2x6x6x32xf32, #tpu.memory_space<vmem>>, vector<2x1x6x32xf32>
    %c0_147 = arith.constant 0 : index
    %c5_148 = arith.constant 5 : index
    %c0_149 = arith.constant 0 : index
    %c0_150 = arith.constant 0 : index
    %67 = vector.load %arg10[%c0_147, %c5_148, %c0_149, %c0_150] : memref<2x6x6x32xf32, #tpu.memory_space<vmem>>, vector<2x1x6x32xf32>
    tpu.vector_store %arg10[%c0_147, %c5_148, %c0_149, %c0_150], %66 {strides = array<i32>} : memref<2x6x6x32xf32, #tpu.memory_space<vmem>>, vector<2x1x6x32xf32>,
    %c0_151 = arith.constant 0 : index
    %c0_152 = arith.constant 0 : index
    %c0_153 = arith.constant 0 : index
    %c0_154 = arith.constant 0 : index
    %68 = vector.load %arg10[%c0_151, %c0_152, %c0_153, %c0_154] : memref<2x6x6x32xf32, #tpu.memory_space<vmem>>, vector<2x4x4x32xf32>
    %c0_155 = arith.constant 0 : index
    %c0_156 = arith.constant 0 : index
    %c0_157 = arith.constant 0 : index
    %c0_158 = arith.constant 0 : index
    %69 = vector.load %arg11[%c0_155, %c0_156, %c0_157, %c0_158] : memref<2x4x4x288xf32, #tpu.memory_space<vmem>>, vector<2x4x4x32xf32>
    tpu.vector_store %arg11[%c0_155, %c0_156, %c0_157, %c0_158], %68 {strides = array<i32>} : memref<2x4x4x288xf32, #tpu.memory_space<vmem>>, vector<2x4x4x32xf32>,
    %c0_159 = arith.constant 0 : index
    %c0_160 = arith.constant 0 : index
    %c1_161 = arith.constant 1 : index
    %c0_162 = arith.constant 0 : index
    %70 = vector.load %arg10[%c0_159, %c0_160, %c1_161, %c0_162] : memref<2x6x6x32xf32, #tpu.memory_space<vmem>>, vector<2x4x4x32xf32>
    %c0_163 = arith.constant 0 : index
    %c0_164 = arith.constant 0 : index
    %c0_165 = arith.constant 0 : index
    %c32_166 = arith.constant 32 : index
    %71 = vector.load %arg11[%c0_163, %c0_164, %c0_165, %c32_166] : memref<2x4x4x288xf32, #tpu.memory_space<vmem>>, vector<2x4x4x32xf32>
    tpu.vector_store %arg11[%c0_163, %c0_164, %c0_165, %c32_166], %70 {strides = array<i32>} : memref<2x4x4x288xf32, #tpu.memory_space<vmem>>, vector<2x4x4x32xf32>,
    %c0_167 = arith.constant 0 : index
    %c0_168 = arith.constant 0 : index
    %c2_169 = arith.constant 2 : index
    %c0_170 = arith.constant 0 : index
    %72 = vector.load %arg10[%c0_167, %c0_168, %c2_169, %c0_170] : memref<2x6x6x32xf32, #tpu.memory_space<vmem>>, vector<2x4x4x32xf32>
    %c0_171 = arith.constant 0 : index
    %c0_172 = arith.constant 0 : index
    %c0_173 = arith.constant 0 : index
    %c64_174 = arith.constant 64 : index
    %73 = vector.load %arg11[%c0_171, %c0_172, %c0_173, %c64_174] : memref<2x4x4x288xf32, #tpu.memory_space<vmem>>, vector<2x4x4x32xf32>
    tpu.vector_store %arg11[%c0_171, %c0_172, %c0_173, %c64_174], %72 {strides = array<i32>} : memref<2x4x4x288xf32, #tpu.memory_space<vmem>>, vector<2x4x4x32xf32>,
    %c0_175 = arith.constant 0 : index
    %c1_176 = arith.constant 1 : index
    %c0_177 = arith.constant 0 : index
    %c0_178 = arith.constant 0 : index
    %74 = vector.load %arg10[%c0_175, %c1_176, %c0_177, %c0_178] : memref<2x6x6x32xf32, #tpu.memory_space<vmem>>, vector<2x4x4x32xf32>
    %c0_179 = arith.constant 0 : index
    %c0_180 = arith.constant 0 : index
    %c0_181 = arith.constant 0 : index
    %c96_182 = arith.constant 96 : index
    %75 = vector.load %arg11[%c0_179, %c0_180, %c0_181, %c96_182] : memref<2x4x4x288xf32, #tpu.memory_space<vmem>>, vector<2x4x4x32xf32>
    tpu.vector_store %arg11[%c0_179, %c0_180, %c0_181, %c96_182], %74 {strides = array<i32>} : memref<2x4x4x288xf32, #tpu.memory_space<vmem>>, vector<2x4x4x32xf32>,
    %c0_183 = arith.constant 0 : index
    %c1_184 = arith.constant 1 : index
    %c1_185 = arith.constant 1 : index
    %c0_186 = arith.constant 0 : index
    %76 = vector.load %arg10[%c0_183, %c1_184, %c1_185, %c0_186] : memref<2x6x6x32xf32, #tpu.memory_space<vmem>>, vector<2x4x4x32xf32>
    %c0_187 = arith.constant 0 : index
    %c0_188 = arith.constant 0 : index
    %c0_189 = arith.constant 0 : index
    %c128_190 = arith.constant 128 : index
    %77 = vector.load %arg11[%c0_187, %c0_188, %c0_189, %c128_190] : memref<2x4x4x288xf32, #tpu.memory_space<vmem>>, vector<2x4x4x32xf32>
    tpu.vector_store %arg11[%c0_187, %c0_188, %c0_189, %c128_190], %76 {strides = array<i32>} : memref<2x4x4x288xf32, #tpu.memory_space<vmem>>, vector<2x4x4x32xf32>,
    %c0_191 = arith.constant 0 : index
    %c1_192 = arith.constant 1 : index
    %c2_193 = arith.constant 2 : index
    %c0_194 = arith.constant 0 : index
    %78 = vector.load %arg10[%c0_191, %c1_192, %c2_193, %c0_194] : memref<2x6x6x32xf32, #tpu.memory_space<vmem>>, vector<2x4x4x32xf32>
    %c0_195 = arith.constant 0 : index
    %c0_196 = arith.constant 0 : index
    %c0_197 = arith.constant 0 : index
    %c160_198 = arith.constant 160 : index
    %79 = vector.load %arg11[%c0_195, %c0_196, %c0_197, %c160_198] : memref<2x4x4x288xf32, #tpu.memory_space<vmem>>, vector<2x4x4x32xf32>
    tpu.vector_store %arg11[%c0_195, %c0_196, %c0_197, %c160_198], %78 {strides = array<i32>} : memref<2x4x4x288xf32, #tpu.memory_space<vmem>>, vector<2x4x4x32xf32>,
    %c0_199 = arith.constant 0 : index
    %c2_200 = arith.constant 2 : index
    %c0_201 = arith.constant 0 : index
    %c0_202 = arith.constant 0 : index
    %80 = vector.load %arg10[%c0_199, %c2_200, %c0_201, %c0_202] : memref<2x6x6x32xf32, #tpu.memory_space<vmem>>, vector<2x4x4x32xf32>
    %c0_203 = arith.constant 0 : index
    %c0_204 = arith.constant 0 : index
    %c0_205 = arith.constant 0 : index
    %c192_206 = arith.constant 192 : index
    %81 = vector.load %arg11[%c0_203, %c0_204, %c0_205, %c192_206] : memref<2x4x4x288xf32, #tpu.memory_space<vmem>>, vector<2x4x4x32xf32>
    tpu.vector_store %arg11[%c0_203, %c0_204, %c0_205, %c192_206], %80 {strides = array<i32>} : memref<2x4x4x288xf32, #tpu.memory_space<vmem>>, vector<2x4x4x32xf32>,
    %c0_207 = arith.constant 0 : index
    %c2_208 = arith.constant 2 : index
    %c1_209 = arith.constant 1 : index
    %c0_210 = arith.constant 0 : index
    %82 = vector.load %arg10[%c0_207, %c2_208, %c1_209, %c0_210] : memref<2x6x6x32xf32, #tpu.memory_space<vmem>>, vector<2x4x4x32xf32>
    %c0_211 = arith.constant 0 : index
    %c0_212 = arith.constant 0 : index
    %c0_213 = arith.constant 0 : index
    %c224_214 = arith.constant 224 : index
    %83 = vector.load %arg11[%c0_211, %c0_212, %c0_213, %c224_214] : memref<2x4x4x288xf32, #tpu.memory_space<vmem>>, vector<2x4x4x32xf32>
    tpu.vector_store %arg11[%c0_211, %c0_212, %c0_213, %c224_214], %82 {strides = array<i32>} : memref<2x4x4x288xf32, #tpu.memory_space<vmem>>, vector<2x4x4x32xf32>,
    %c0_215 = arith.constant 0 : index
    %c2_216 = arith.constant 2 : index
    %c2_217 = arith.constant 2 : index
    %c0_218 = arith.constant 0 : index
    %84 = vector.load %arg10[%c0_215, %c2_216, %c2_217, %c0_218] : memref<2x6x6x32xf32, #tpu.memory_space<vmem>>, vector<2x4x4x32xf32>
    %c0_219 = arith.constant 0 : index
    %c0_220 = arith.constant 0 : index
    %c0_221 = arith.constant 0 : index
    %c256_222 = arith.constant 256 : index
    %85 = vector.load %arg11[%c0_219, %c0_220, %c0_221, %c256_222] : memref<2x4x4x288xf32, #tpu.memory_space<vmem>>, vector<2x4x4x32xf32>
    tpu.vector_store %arg11[%c0_219, %c0_220, %c0_221, %c256_222], %84 {strides = array<i32>} : memref<2x4x4x288xf32, #tpu.memory_space<vmem>>, vector<2x4x4x32xf32>,
    %c0_223 = arith.constant 0 : index
    %c0_224 = arith.constant 0 : index
    %c0_225 = arith.constant 0 : index
    %c0_226 = arith.constant 0 : index
    %86 = vector.load %arg11[%c0_223, %c0_224, %c0_225, %c0_226] : memref<2x4x4x288xf32, #tpu.memory_space<vmem>>, vector<2x4x4x288xf32>
    %c0_227 = arith.constant 0 : index
    %c0_228 = arith.constant 0 : index
    %87 = vector.load %arg4[%c0_227, %c0_228] : memref<288x32xbf16, #tpu.memory_space<vmem>>, vector<288x32xbf16>
    %88 = arith.truncf %86 : vector<2x4x4x288xf32> to vector<2x4x4x288xbf16>
    %cst_229 = arith.constant dense<0.000000e+00> : vector<2x4x4x32xf32>
    %89 = tpu.matmul %88, %87, %cst_229 {dimension_numbers = #tpu.dot_dimension_numbers<[3], [0], [0, 1, 2], [1], [0, 0, 0, 1, 0, 2, 1, 1], [], []>} : vector<2x4x4x288xbf16>, vector<288x32xbf16>, vector<2x4x4x32xf32> -> vector<2x4x4x32xf32>
    %c0_230 = arith.constant 0 : index
    %c0_231 = arith.constant 0 : index
    %90 = vector.load %arg5[%c0_230, %c0_231] : memref<1x32xf32, #tpu.memory_space<vmem>>, vector<1x32xf32>
    %c0_232 = arith.constant 0 : index
    %c0_233 = arith.constant 0 : index
    %91 = vector.load %arg6[%c0_232, %c0_233] : memref<1x32xf32, #tpu.memory_space<vmem>>, vector<1x32xf32>
    %cst_234 = arith.constant dense<0.000000e+00> : vector<32xf32>
    %92 = vector.multi_reduction <add>, %89, %cst_234 [0, 1, 2] : vector<2x4x4x32xf32> to vector<32xf32>
    %93 = vector.shape_cast %92 : vector<32xf32> to vector<1x1x1x32xf32>
    %94 = arith.mulf %89, %89 : vector<2x4x4x32xf32>
    %cst_235 = arith.constant dense<0.000000e+00> : vector<32xf32>
    %95 = vector.multi_reduction <add>, %94, %cst_235 [0, 1, 2] : vector<2x4x4x32xf32> to vector<32xf32>
    %96 = vector.shape_cast %95 : vector<32xf32> to vector<1x1x1x32xf32>
    %cst_236 = arith.constant 3.125000e-02 : f32
    %97 = vector.broadcast %cst_236 : f32 to vector<1x1x1x32xf32>
    %98 = arith.mulf %93, %97 : vector<1x1x1x32xf32>
    %cst_237 = arith.constant 3.125000e-02 : f32
    %99 = vector.broadcast %cst_237 : f32 to vector<1x1x1x32xf32>
    %100 = arith.mulf %96, %99 : vector<1x1x1x32xf32>
    %101 = arith.mulf %98, %98 : vector<1x1x1x32xf32>
    %102 = arith.subf %100, %101 : vector<1x1x1x32xf32>
    %cst_238 = arith.constant 9.99999974E-6 : f32
    %103 = vector.broadcast %cst_238 : f32 to vector<1x1x1x32xf32>
    %104 = arith.addf %102, %103 : vector<1x1x1x32xf32>
    %105 = math.rsqrt %104 : vector<1x1x1x32xf32>
    %106 = vector.broadcast %98 : vector<1x1x1x32xf32> to vector<2x4x4x32xf32>
    %107 = arith.subf %89, %106 : vector<2x4x4x32xf32>
    %108 = vector.shape_cast %90 : vector<1x32xf32> to vector<1x1x1x32xf32>
    %109 = arith.mulf %105, %108 : vector<1x1x1x32xf32>
    %110 = vector.broadcast %109 : vector<1x1x1x32xf32> to vector<2x4x4x32xf32>
    %111 = arith.mulf %107, %110 : vector<2x4x4x32xf32>
    %112 = vector.shape_cast %91 : vector<1x32xf32> to vector<1x1x1x32xf32>
    %113 = vector.broadcast %112 : vector<1x1x1x32xf32> to vector<2x4x4x32xf32>
    %114 = arith.addf %111, %113 : vector<2x4x4x32xf32>
    %115 = arith.addf %114, %0 : vector<2x4x4x32xf32>
    %cst_239 = arith.constant 0.000000e+00 : f32
    %116 = vector.broadcast %cst_239 : f32 to vector<2x4x4x32xf32>
    %117 = arith.maximumf %115, %116 : vector<2x4x4x32xf32>
    %c0_240 = arith.constant 0 : index
    %c0_241 = arith.constant 0 : index
    %c0_242 = arith.constant 0 : index
    %c0_243 = arith.constant 0 : index
    %118 = vector.load %arg7[%c0_240, %c0_241, %c0_242, %c0_243] : memref<2x4x4x32xf32, #tpu.memory_space<vmem>>, vector<2x4x4x32xf32>
    tpu.vector_store %arg7[%c0_240, %c0_241, %c0_242, %c0_243], %117 {strides = array<i32>} : memref<2x4x4x32xf32, #tpu.memory_space<vmem>>, vector<2x4x4x32xf32>,
    return
  }
}

</mosaic_0001>

<llo_original>
// kernel: tpu_custom_call.1
$region0: #{tpu_custom_call.1}
  #allocation0 [shape = 'u32[]', space=smem, size = 0x4, offset = 0x4, fixed_abs, tag = 'smem constant byte address 0x4 - core index']
  #allocation1 [shape = 'u32[144,128]{1,0:T(1,128)}', space=vmem, size = 0x12000, scoped, tag = 'internal scratch']
  #allocation2 [shape = 'f32[2,6,6,32]{3,2,1,0:T(8,128)}', space=vmem, size = 0xc000, scoped, tag = 'scratch operand']
  #allocation3 [shape = 'f32[2,4,4,288]{3,2,1,0:T(4,128)}', space=vmem, size = 0xc000, scoped, tag = 'scratch operand']
  #allocation4 [shape = 'f32[2,6,6,32]{3,2,1,0:T(8,128)}', space=vmem, size = 0xc000, scoped, tag = 'scratch operand']
  #allocation5 [shape = 'f32[2,4,4,288]{3,2,1,0:T(4,128)}', space=vmem, size = 0xc000, scoped, tag = 'scratch operand']
  %s0 = inlined_call_operand.vmem [shape: f32[2,4,4,32], index: 0, kind: input, shape index: {}]
  %s1 = inlined_call_operand.vmem [shape: bf16[288,32], index: 1, kind: input, shape index: {}]
  %s2 = inlined_call_operand.vmem [shape: f32[1,32], index: 2, kind: input, shape index: {}]
  %s3 = inlined_call_operand.vmem [shape: f32[1,32], index: 3, kind: input, shape index: {}]
  %s4 = inlined_call_operand.vmem [shape: bf16[288,32], index: 4, kind: input, shape index: {}]
  %s5 = inlined_call_operand.vmem [shape: f32[1,32], index: 5, kind: input, shape index: {}]
  %s6 = inlined_call_operand.vmem [shape: f32[1,32], index: 6, kind: input, shape index: {}]
  %s7 = inlined_call_operand.hbm [shape: f32[2,4,4,32], index: 7, kind: output, shape index: {}]
  %s8 = sld [smem:[#allocation0]]
  $region38: #{tpu_custom_call.1} parent=0
    _
  %s10 = ssub.s32 1, %s8
  %s11 = scalar_select 0, %s10, %s8
  $region1: #{tpu_custom_call.1} parent=0
    #allocation6 [shape = 'u8[16384]{0}', space=vmem, size = 0x4000, scoped, tag = 'output window, operand 0, single buffered']
    #allocation7 [shape = 's32[1]{0}', space=sflag, size = 0x4, scoped, tag = 'scoped memory for tpu_custom_call.1']
    %12 = vsyncpa [#allocation7], 0
    // Predicated region
    $region2: #{tpu_custom_call.1} parent=1 // pred_check
      _
    $region3: #{tpu_custom_call.1} parent=1 // pred_check_branch
      %14 = sbr.rel (0) target = $region5
    $region4: #{tpu_custom_call.1} parent=1 // pred_region
      _
    $region5: #{tpu_custom_call.1} parent=1 // pred_fallthru
      _
    // Predicated region
    $region6: #{tpu_custom_call.1} parent=1 // pred_check
      _
    $region7: #{tpu_custom_call.1} parent=1 // pred_check_branch
      %16 = sbr.rel (0) target = $region9
    $region8: #{tpu_custom_call.1} parent=1 // pred_region
      _
    $region9: #{tpu_custom_call.1} parent=1 // pred_fallthru
      _
    // Predicated region
    $region10: #{tpu_custom_call.1} parent=1 // pred_check
      _
    $region11: #{tpu_custom_call.1} parent=1 // pred_check_branch
      %18 = sbr.rel (0) target = $region13
    $region12: #{tpu_custom_call.1} parent=1 // pred_region
      _
    $region13: #{tpu_custom_call.1} parent=1 // pred_fallthru
      _
    // Predicated region
    $region14: #{tpu_custom_call.1} parent=1 // pred_check
      _
    $region15: #{tpu_custom_call.1} parent=1 // pred_check_branch
      %20 = sbr.rel (0) target = $region17
    $region16: #{tpu_custom_call.1} parent=1 // pred_region
      _
    $region17: #{tpu_custom_call.1} parent=1 // pred_fallthru
      _
    // Predicated region
    $region18: #{tpu_custom_call.1} parent=1 // pred_check
      _
    $region19: #{tpu_custom_call.1} parent=1 // pred_check_branch
      %22 = sbr.rel (0) target = $region21
    $region20: #{tpu_custom_call.1} parent=1 // pred_region
      _
    $region21: #{tpu_custom_call.1} parent=1 // pred_fallthru
      _
    // Predicated region
    $region22: #{tpu_custom_call.1} parent=1 // pred_check
      _
    $region23: #{tpu_custom_call.1} parent=1 // pred_check_branch
      %24 = sbr.rel (0) target = $region25
    $region24: #{tpu_custom_call.1} parent=1 // pred_region
      _
    $region25: #{tpu_custom_call.1} parent=1 // pred_fallthru
      _
    // Predicated region
    $region26: #{tpu_custom_call.1} parent=1 // pred_check
      _
    $region27: #{tpu_custom_call.1} parent=1 // pred_check_branch
      %26 = sbr.rel (0) target = $region29
    $region28: #{tpu_custom_call.1} parent=1 // pred_region
      _
    $region29: #{tpu_custom_call.1} parent=1 // pred_fallthru
      _
    %v28 = vld [vmem:[%s0] sm:$0xf]
    %v29 = vld [vmem:[%s0 + $0x4] sm:$0xf]
    %v30 = vld [vmem:[%s0 + $0x8] sm:$0xf]
    %v31 = vld [vmem:[%s0 + $0xc] sm:$0xf]
    %v32 = vld [vmem:[%s0 + $0x10] sm:$0xf]
    %v33 = vld [vmem:[%s0 + $0x14] sm:$0xf]
    %v34 = vld [vmem:[%s0 + $0x18] sm:$0xf]
    %v35 = vld [vmem:[%s0 + $0x1c] sm:$0xf]
    %s36 = scalar_lea.vmem [#allocation2], 8
    %vm37 = vcmask 257024
    %38 = vst.msk [vmem:[%s36 + $0x1] sm:$0xf] %vm37, %v28
    %39 = vst.msk [vmem:[%s36 + $0x9] sm:$0xf] %vm37, %v29
    %40 = vst.msk [vmem:[%s36 + $0x11] sm:$0xf] %vm37, %v30
    %41 = vst.msk [vmem:[%s36 + $0x19] sm:$0xf] %vm37, %v31
    %42 = vst.msk [vmem:[%s36 + $0x31] sm:$0xf] %vm37, %v32
    %43 = vst.msk [vmem:[%s36 + $0x39] sm:$0xf] %vm37, %v33
    %44 = vst.msk [vmem:[%s36 + $0x41] sm:$0xf] %vm37, %v34
    %45 = vst.msk [vmem:[%s36 + $0x49] sm:$0xf] %vm37, %v35
    %v46 = vld [vmem:[%s36 + $0x2] sm:$0x1]
    %v47 = vld [vmem:[%s36 + $0xa] sm:$0x1]
    %v48 = vld [vmem:[%s36 + $0x12] sm:$0x1]
    %v49 = vld [vmem:[%s36 + $0x1a] sm:$0x1]
    %v50 = vld [vmem:[%s36 + $0x32] sm:$0x1]
    %v51 = vld [vmem:[%s36 + $0x3a] sm:$0x1]
    %v52 = vld [vmem:[%s36 + $0x42] sm:$0x1]
    %v53 = vld [vmem:[%s36 + $0x4a] sm:$0x1]
    %vm54 = vcmask 253952
    %55 = vst.msk [vmem:[%s36] sm:$0x1] %vm54, %v46
    %56 = vst.msk [vmem:[%s36 + $0x8] sm:$0x1] %vm54, %v47
    %57 = vst.msk [vmem:[%s36 + $0x10] sm:$0x1] %vm54, %v48
    %58 = vst.msk [vmem:[%s36 + $0x18] sm:$0x1] %vm54, %v49
    %59 = vst.msk [vmem:[%s36 + $0x30] sm:$0x1] %vm54, %v50
    %60 = vst.msk [vmem:[%s36 + $0x38] sm:$0x1] %vm54, %v51
    %61 = vst.msk [vmem:[%s36 + $0x40] sm:$0x1] %vm54, %v52
    %62 = vst.msk [vmem:[%s36 + $0x48] sm:$0x1] %vm54, %v53
    %v63 = vld [vmem:[%s36 + $0x3] sm:$0x1]
    %v64 = vld [vmem:[%s36 + $0xb] sm:$0x1]
    %v65 = vld [vmem:[%s36 + $0x13] sm:$0x1]
    %v66 = vld [vmem:[%s36 + $0x1b] sm:$0x1]
    %v67 = vld [vmem:[%s36 + $0x33] sm:$0x1]
    %v68 = vld [vmem:[%s36 + $0x3b] sm:$0x1]
    %v69 = vld [vmem:[%s36 + $0x43] sm:$0x1]
    %v70 = vld [vmem:[%s36 + $0x4b] sm:$0x1]
    %71 = vst.msk [vmem:[%s36 + $0x5] sm:$0x1] %vm54, %v63
    %72 = vst.msk [vmem:[%s36 + $0xd] sm:$0x1] %vm54, %v64
    %73 = vst.msk [vmem:[%s36 + $0x15] sm:$0x1] %vm54, %v65
    %74 = vst.msk [vmem:[%s36 + $0x1d] sm:$0x1] %vm54, %v66
    %75 = vst.msk [vmem:[%s36 + $0x35] sm:$0x1] %vm54, %v67
    %76 = vst.msk [vmem:[%s36 + $0x3d] sm:$0x1] %vm54, %v68
    %77 = vst.msk [vmem:[%s36 + $0x45] sm:$0x1] %vm54, %v69
    %78 = vst.msk [vmem:[%s36 + $0x4d] sm:$0x1] %vm54, %v70
    %s79 = scalar_lea.vmem [#allocation2], 16
    %v80 = vld [vmem:[%s79] sm:$0x3f]
    %v81 = vld [vmem:[%s79 + $0x30] sm:$0x3f]
    %vm82 = vcmask 259072
    %83 = vst.msk [vmem:[#allocation2] sm:$0x3f] %vm82, %v80
    %84 = vst.msk [vmem:[#allocation2 + $0x30] sm:$0x3f] %vm82, %v81
    %s85 = scalar_lea.vmem [#allocation2], 24
    %v86 = vld [vmem:[%s85] sm:$0x3f]
    %v87 = vld [vmem:[%s85 + $0x30] sm:$0x3f]
    %s88 = scalar_lea.vmem [#allocation2], 40
    %89 = vst.msk [vmem:[%s88] sm:$0x3f] %vm82, %v86
    %90 = vst.msk [vmem:[%s88 + $0x30] sm:$0x3f] %vm82, %v87
    %v91 = vld [vmem:[#allocation2] sm:$0xf]
    %v92 = vld [vmem:[#allocation2 + $0x8] sm:$0xf]
    %v93 = vld [vmem:[#allocation2 + $0x10] sm:$0xf]
    %v94 = vld [vmem:[#allocation2 + $0x18] sm:$0xf]
    %v95 = vld [vmem:[#allocation2 + $0x30] sm:$0xf]
    %v96 = vld [vmem:[#allocation2 + $0x38] sm:$0xf]
    %v97 = vld [vmem:[#allocation2 + $0x40] sm:$0xf]
    %v98 = vld [vmem:[#allocation2 + $0x48] sm:$0xf]
    %99 = vst.msk [vmem:[#allocation3] sm:$0xf] %vm37, %v91
    %100 = vst.msk [vmem:[#allocation3 + $0xc] sm:$0xf] %vm37, %v92
    %101 = vst.msk [vmem:[#allocation3 + $0x18] sm:$0xf] %vm37, %v93
    %102 = vst.msk [vmem:[#allocation3 + $0x24] sm:$0xf] %vm37, %v94
    %103 = vst.msk [vmem:[#allocation3 + $0x30] sm:$0xf] %vm37, %v95
    %104 = vst.msk [vmem:[#allocation3 + $0x3c] sm:$0xf] %vm37, %v96
    %105 = vst.msk [vmem:[#allocation3 + $0x48] sm:$0xf] %vm37, %v97
    %106 = vst.msk [vmem:[#allocation3 + $0x54] sm:$0xf] %vm37, %v98
    %v107 = vld [vmem:[#allocation2 + $0x1] sm:$0xf]
    %v108 = vld [vmem:[#allocation2 + $0x9] sm:$0xf]
    %v109 = vld [vmem:[#allocation2 + $0x11] sm:$0xf]
    %v110 = vld [vmem:[#allocation2 + $0x19] sm:$0xf]
    %v111 = vld [vmem:[#allocation2 + $0x31] sm:$0xf]
    %v112 = vld [vmem:[#allocation2 + $0x39] sm:$0xf]
    %v113 = vld [vmem:[#allocation2 + $0x41] sm:$0xf]
    %v114 = vld [vmem:[#allocation2 + $0x49] sm:$0xf]
    %123 = vrot.lane.b32.xlu0 %v107, 32
    %v124 = vpop.permute.xlu0 %123
    %125 = vrot.lane.b32.xlu0 %v108, 32
    %v126 = vpop.permute.xlu0 %125
    %127 = vrot.lane.b32.xlu0 %v109, 32
    %v128 = vpop.permute.xlu0 %127
    %129 = vrot.lane.b32.xlu0 %v110, 32
    %v130 = vpop.permute.xlu0 %129
    %131 = vrot.lane.b32.xlu0 %v111, 32
    %v132 = vpop.permute.xlu0 %131
    %133 = vrot.lane.b32.xlu0 %v112, 32
    %v134 = vpop.permute.xlu0 %133
    %135 = vrot.lane.b32.xlu0 %v113, 32
    %v136 = vpop.permute.xlu0 %135
    %137 = vrot.lane.b32.xlu0 %v114, 32
    %v138 = vpop.permute.xlu0 %137
    %vm147 = vcmask 519424
    %148 = vst.msk [vmem:[#allocation3] sm:$0xf] %vm147, %v124
    %149 = vst.msk [vmem:[#allocation3 + $0xc] sm:$0xf] %vm147, %v126
    %150 = vst.msk [vmem:[#allocation3 + $0x18] sm:$0xf] %vm147, %v128
    %151 = vst.msk [vmem:[#allocation3 + $0x24] sm:$0xf] %vm147, %v130
    %152 = vst.msk [vmem:[#allocation3 + $0x30] sm:$0xf] %vm147, %v132
    %153 = vst.msk [vmem:[#allocation3 + $0x3c] sm:$0xf] %vm147, %v134
    %154 = vst.msk [vmem:[#allocation3 + $0x48] sm:$0xf] %vm147, %v136
    %155 = vst.msk [vmem:[#allocation3 + $0x54] sm:$0xf] %vm147, %v138
    %v156 = vld [vmem:[#allocation2 + $0x2] sm:$0xf]
    %v157 = vld [vmem:[#allocation2 + $0xa] sm:$0xf]
    %v158 = vld [vmem:[#allocation2 + $0x12] sm:$0xf]
    %v159 = vld [vmem:[#allocation2 + $0x1a] sm:$0xf]
    %v160 = vld [vmem:[#allocation2 + $0x32] sm:$0xf]
    %v161 = vld [vmem:[#allocation2 + $0x3a] sm:$0xf]
    %v162 = vld [vmem:[#allocation2 + $0x42] sm:$0xf]
    %v163 = vld [vmem:[#allocation2 + $0x4a] sm:$0xf]
    %172 = vrot.lane.b32.xlu0 %v156, 64
    %v173 = vpop.permute.xlu0 %172
    %174 = vrot.lane.b32.xlu0 %v157, 64
    %v175 = vpop.permute.xlu0 %174
    %176 = vrot.lane.b32.xlu0 %v158, 64
    %v177 = vpop.permute.xlu0 %176
    %178 = vrot.lane.b32.xlu0 %v159, 64
    %v179 = vpop.permute.xlu0 %178
    %180 = vrot.lane.b32.xlu0 %v160, 64
    %v181 = vpop.permute.xlu0 %180
    %182 = vrot.lane.b32.xlu0 %v161, 64
    %v183 = vpop.permute.xlu0 %182
    %184 = vrot.lane.b32.xlu0 %v162, 64
    %v185 = vpop.permute.xlu0 %184
    %186 = vrot.lane.b32.xlu0 %v163, 64
    %v187 = vpop.permute.xlu0 %186
    %vm196 = vcmask 781824
    %197 = vst.msk [vmem:[#allocation3] sm:$0xf] %vm196, %v173
    %198 = vst.msk [vmem:[#allocation3 + $0xc] sm:$0xf] %vm196, %v175
    %199 = vst.msk [vmem:[#allocation3 + $0x18] sm:$0xf] %vm196, %v177
    %200 = vst.msk [vmem:[#allocation3 + $0x24] sm:$0xf] %vm196, %v179
    %201 = vst.msk [vmem:[#allocation3 + $0x30] sm:$0xf] %vm196, %v181
    %202 = vst.msk [vmem:[#allocation3 + $0x3c] sm:$0xf] %vm196, %v183
    %203 = vst.msk [vmem:[#allocation3 + $0x48] sm:$0xf] %vm196, %v185
    %204 = vst.msk [vmem:[#allocation3 + $0x54] sm:$0xf] %vm196, %v187
    %v205 = vld [vmem:[%s36] sm:$0xf]
    %v206 = vld [vmem:[%s36 + $0x8] sm:$0xf]
    %v207 = vld [vmem:[%s36 + $0x10] sm:$0xf]
    %v208 = vld [vmem:[%s36 + $0x18] sm:$0xf]
    %v209 = vld [vmem:[%s36 + $0x30] sm:$0xf]
    %v210 = vld [vmem:[%s36 + $0x38] sm:$0xf]
    %v211 = vld [vmem:[%s36 + $0x40] sm:$0xf]
    %v212 = vld [vmem:[%s36 + $0x48] sm:$0xf]
    %221 = vrot.lane.b32.xlu0 %v205, 96
    %v222 = vpop.permute.xlu0 %221
    %223 = vrot.lane.b32.xlu0 %v206, 96
    %v224 = vpop.permute.xlu0 %223
    %225 = vrot.lane.b32.xlu0 %v207, 96
    %v226 = vpop.permute.xlu0 %225
    %227 = vrot.lane.b32.xlu0 %v208, 96
    %v228 = vpop.permute.xlu0 %227
    %229 = vrot.lane.b32.xlu0 %v209, 96
    %v230 = vpop.permute.xlu0 %229
    %231 = vrot.lane.b32.xlu0 %v210, 96
    %v232 = vpop.permute.xlu0 %231
    %233 = vrot.lane.b32.xlu0 %v211, 96
    %v234 = vpop.permute.xlu0 %233
    %235 = vrot.lane.b32.xlu0 %v212, 96
    %v236 = vpop.permute.xlu0 %235
    %vm245 = vcmask 1044224
    %246 = vst.msk [vmem:[#allocation3] sm:$0xf] %vm245, %v222
    %247 = vst.msk [vmem:[#allocation3 + $0xc] sm:$0xf] %vm245, %v224
    %248 = vst.msk [vmem:[#allocation3 + $0x18] sm:$0xf] %vm245, %v226
    %249 = vst.msk [vmem:[#allocation3 + $0x24] sm:$0xf] %vm245, %v228
    %250 = vst.msk [vmem:[#allocation3 + $0x30] sm:$0xf] %vm245, %v230
    %251 = vst.msk [vmem:[#allocation3 + $0x3c] sm:$0xf] %vm245, %v232
    %252 = vst.msk [vmem:[#allocation3 + $0x48] sm:$0xf] %vm245, %v234
    %253 = vst.msk [vmem:[#allocation3 + $0x54] sm:$0xf] %vm245, %v236
    %v254 = vld [vmem:[%s36 + $0x1] sm:$0xf]
    %v255 = vld [vmem:[%s36 + $0x9] sm:$0xf]
    %v256 = vld [vmem:[%s36 + $0x11] sm:$0xf]
    %v257 = vld [vmem:[%s36 + $0x19] sm:$0xf]
    %v258 = vld [vmem:[%s36 + $0x31] sm:$0xf]
    %v259 = vld [vmem:[%s36 + $0x39] sm:$0xf]
    %v260 = vld [vmem:[%s36 + $0x41] sm:$0xf]
    %v261 = vld [vmem:[%s36 + $0x49] sm:$0xf]
    %262 = vst.msk [vmem:[#allocation3 + $0x4] sm:$0xf] %vm37, %v254
    %263 = vst.msk [vmem:[#allocation3 + $0x10] sm:$0xf] %vm37, %v255
    %264 = vst.msk [vmem:[#allocation3 + $0x1c] sm:$0xf] %vm37, %v256
    %265 = vst.msk [vmem:[#allocation3 + $0x28] sm:$0xf] %vm37, %v257
    %266 = vst.msk [vmem:[#allocation3 + $0x34] sm:$0xf] %vm37, %v258
    %267 = vst.msk [vmem:[#allocation3 + $0x40] sm:$0xf] %vm37, %v259
    %268 = vst.msk [vmem:[#allocation3 + $0x4c] sm:$0xf] %vm37, %v260
    %269 = vst.msk [vmem:[#allocation3 + $0x58] sm:$0xf] %vm37, %v261
    %v270 = vld [vmem:[%s36 + $0x2] sm:$0xf]
    %v271 = vld [vmem:[%s36 + $0xa] sm:$0xf]
    %v272 = vld [vmem:[%s36 + $0x12] sm:$0xf]
    %v273 = vld [vmem:[%s36 + $0x1a] sm:$0xf]
    %v274 = vld [vmem:[%s36 + $0x32] sm:$0xf]
    %v275 = vld [vmem:[%s36 + $0x3a] sm:$0xf]
    %v276 = vld [vmem:[%s36 + $0x42] sm:$0xf]
    %v277 = vld [vmem:[%s36 + $0x4a] sm:$0xf]
    %286 = vrot.lane.b32.xlu0 %v270, 32
    %v287 = vpop.permute.xlu0 %286
    %288 = vrot.lane.b32.xlu0 %v271, 32
    %v289 = vpop.permute.xlu0 %288
    %290 = vrot.lane.b32.xlu0 %v272, 32
    %v291 = vpop.permute.xlu0 %290
    %292 = vrot.lane.b32.xlu0 %v273, 32
    %v293 = vpop.permute.xlu0 %292
    %294 = vrot.lane.b32.xlu0 %v274, 32
    %v295 = vpop.permute.xlu0 %294
    %296 = vrot.lane.b32.xlu0 %v275, 32
    %v297 = vpop.permute.xlu0 %296
    %298 = vrot.lane.b32.xlu0 %v276, 32
    %v299 = vpop.permute.xlu0 %298
    %300 = vrot.lane.b32.xlu0 %v277, 32
    %v301 = vpop.permute.xlu0 %300
    %310 = vst.msk [vmem:[#allocation3 + $0x4] sm:$0xf] %vm147, %v287
    %311 = vst.msk [vmem:[#allocation3 + $0x10] sm:$0xf] %vm147, %v289
    %312 = vst.msk [vmem:[#allocation3 + $0x1c] sm:$0xf] %vm147, %v291
    %313 = vst.msk [vmem:[#allocation3 + $0x28] sm:$0xf] %vm147, %v293
    %314 = vst.msk [vmem:[#allocation3 + $0x34] sm:$0xf] %vm147, %v295
    %315 = vst.msk [vmem:[#allocation3 + $0x40] sm:$0xf] %vm147, %v297
    %316 = vst.msk [vmem:[#allocation3 + $0x4c] sm:$0xf] %vm147, %v299
    %317 = vst.msk [vmem:[#allocation3 + $0x58] sm:$0xf] %vm147, %v301
    %v318 = vld [vmem:[%s79] sm:$0xf]
    %v319 = vld [vmem:[%s79 + $0x8] sm:$0xf]
    %v320 = vld [vmem:[%s79 + $0x10] sm:$0xf]
    %v321 = vld [vmem:[%s79 + $0x18] sm:$0xf]
    %v322 = vld [vmem:[%s79 + $0x30] sm:$0xf]
    %v323 = vld [vmem:[%s79 + $0x38] sm:$0xf]
    %v324 = vld [vmem:[%s79 + $0x40] sm:$0xf]
    %v325 = vld [vmem:[%s79 + $0x48] sm:$0xf]
    %334 = vrot.lane.b32.xlu0 %v318, 64
    %v335 = vpop.permute.xlu0 %334
    %336 = vrot.lane.b32.xlu0 %v319, 64
    %v337 = vpop.permute.xlu0 %336
    %338 = vrot.lane.b32.xlu0 %v320, 64
    %v339 = vpop.permute.xlu0 %338
    %340 = vrot.lane.b32.xlu0 %v321, 64
    %v341 = vpop.permute.xlu0 %340
    %342 = vrot.lane.b32.xlu0 %v322, 64
    %v343 = vpop.permute.xlu0 %342
    %344 = vrot.lane.b32.xlu0 %v323, 64
    %v345 = vpop.permute.xlu0 %344
    %346 = vrot.lane.b32.xlu0 %v324, 64
    %v347 = vpop.permute.xlu0 %346
    %348 = vrot.lane.b32.xlu0 %v325, 64
    %v349 = vpop.permute.xlu0 %348
    %358 = vst.msk [vmem:[#allocation3 + $0x4] sm:$0xf] %vm196, %v335
    %359 = vst.msk [vmem:[#allocation3 + $0x10] sm:$0xf] %vm196, %v337
    %360 = vst.msk [vmem:[#allocation3 + $0x1c] sm:$0xf] %vm196, %v339
    %361 = vst.msk [vmem:[#allocation3 + $0x28] sm:$0xf] %vm196, %v341
    %362 = vst.msk [vmem:[#allocation3 + $0x34] sm:$0xf] %vm196, %v343
    %363 = vst.msk [vmem:[#allocation3 + $0x40] sm:$0xf] %vm196, %v345
    %364 = vst.msk [vmem:[#allocation3 + $0x4c] sm:$0xf] %vm196, %v347
    %365 = vst.msk [vmem:[#allocation3 + $0x58] sm:$0xf] %vm196, %v349
    %v366 = vld [vmem:[%s79 + $0x1] sm:$0xf]
    %v367 = vld [vmem:[%s79 + $0x9] sm:$0xf]
    %v368 = vld [vmem:[%s79 + $0x11] sm:$0xf]
    %v369 = vld [vmem:[%s79 + $0x19] sm:$0xf]
    %v370 = vld [vmem:[%s79 + $0x31] sm:$0xf]
    %v371 = vld [vmem:[%s79 + $0x39] sm:$0xf]
    %v372 = vld [vmem:[%s79 + $0x41] sm:$0xf]
    %v373 = vld [vmem:[%s79 + $0x49] sm:$0xf]
    %382 = vrot.lane.b32.xlu0 %v366, 96
    %v383 = vpop.permute.xlu0 %382
    %384 = vrot.lane.b32.xlu0 %v367, 96
    %v385 = vpop.permute.xlu0 %384
    %386 = vrot.lane.b32.xlu0 %v368, 96
    %v387 = vpop.permute.xlu0 %386
    %388 = vrot.lane.b32.xlu0 %v369, 96
    %v389 = vpop.permute.xlu0 %388
    %390 = vrot.lane.b32.xlu0 %v370, 96
    %v391 = vpop.permute.xlu0 %390
    %392 = vrot.lane.b32.xlu0 %v371, 96
    %v393 = vpop.permute.xlu0 %392
    %394 = vrot.lane.b32.xlu0 %v372, 96
    %v395 = vpop.permute.xlu0 %394
    %396 = vrot.lane.b32.xlu0 %v373, 96
    %v397 = vpop.permute.xlu0 %396
    %406 = vst.msk [vmem:[#allocation3 + $0x4] sm:$0xf] %vm245, %v383
    %407 = vst.msk [vmem:[#allocation3 + $0x10] sm:$0xf] %vm245, %v385
    %408 = vst.msk [vmem:[#allocation3 + $0x1c] sm:$0xf] %vm245, %v387
    %409 = vst.msk [vmem:[#allocation3 + $0x28] sm:$0xf] %vm245, %v389
    %410 = vst.msk [vmem:[#allocation3 + $0x34] sm:$0xf] %vm245, %v391
    %411 = vst.msk [vmem:[#allocation3 + $0x40] sm:$0xf] %vm245, %v393
    %412 = vst.msk [vmem:[#allocation3 + $0x4c] sm:$0xf] %vm245, %v395
    %413 = vst.msk [vmem:[#allocation3 + $0x58] sm:$0xf] %vm245, %v397
    %v414 = vld [vmem:[%s79 + $0x2] sm:$0xf]
    %v415 = vld [vmem:[%s79 + $0xa] sm:$0xf]
    %v416 = vld [vmem:[%s79 + $0x12] sm:$0xf]
    %v417 = vld [vmem:[%s79 + $0x1a] sm:$0xf]
    %v418 = vld [vmem:[%s79 + $0x32] sm:$0xf]
    %v419 = vld [vmem:[%s79 + $0x3a] sm:$0xf]
    %v420 = vld [vmem:[%s79 + $0x42] sm:$0xf]
    %v421 = vld [vmem:[%s79 + $0x4a] sm:$0xf]
    %422 = vst.msk [vmem:[#allocation3 + $0x8] sm:$0xf] %vm37, %v414
    %423 = vst.msk [vmem:[#allocation3 + $0x14] sm:$0xf] %vm37, %v415
    %424 = vst.msk [vmem:[#allocation3 + $0x20] sm:$0xf] %vm37, %v416
    %425 = vst.msk [vmem:[#allocation3 + $0x2c] sm:$0xf] %vm37, %v417
    %426 = vst.msk [vmem:[#allocation3 + $0x38] sm:$0xf] %vm37, %v418
    %427 = vst.msk [vmem:[#allocation3 + $0x44] sm:$0xf] %vm37, %v419
    %428 = vst.msk [vmem:[#allocation3 + $0x50] sm:$0xf] %vm37, %v420
    %429 = vst.msk [vmem:[#allocation3 + $0x5c] sm:$0xf] %vm37, %v421
    %v430 = vld [vmem:[#allocation3] sm:$0xff]
    %v431 = vld [vmem:[#allocation3 + $0x8] sm:$0xf]
    %v432 = vld [vmem:[#allocation3 + $0xc] sm:$0xff]
    %v433 = vld [vmem:[#allocation3 + $0x14] sm:$0xf]
    %v434 = vld [vmem:[#allocation3 + $0x18] sm:$0xff]
    %v435 = vld [vmem:[#allocation3 + $0x20] sm:$0xf]
    %v436 = vld [vmem:[#allocation3 + $0x24] sm:$0xff]
    %v437 = vld [vmem:[#allocation3 + $0x2c] sm:$0xf]
    %v438 = vld [vmem:[#allocation3 + $0x30] sm:$0xff]
    %v439 = vld [vmem:[#allocation3 + $0x38] sm:$0xf]
    %v440 = vld [vmem:[#allocation3 + $0x3c] sm:$0xff]
    %v441 = vld [vmem:[#allocation3 + $0x44] sm:$0xf]
    %v442 = vld [vmem:[#allocation3 + $0x48] sm:$0xff]
    %v443 = vld [vmem:[#allocation3 + $0x50] sm:$0xf]
    %v444 = vld [vmem:[#allocation3 + $0x54] sm:$0xff]
    %v445 = vld [vmem:[#allocation3 + $0x5c] sm:$0xf]
    %v446 = vld [vmem:[%s1] sm:$0xf]
    %v447 = vld [vmem:[%s1 + $0x4] sm:$0xf]
    %v448 = vld [vmem:[%s1 + $0x8] sm:$0xf]
    %v449 = vld [vmem:[%s1 + $0xc] sm:$0xf]
    %v450 = vld [vmem:[%s1 + $0x10] sm:$0xf]
    %v451 = vld [vmem:[%s1 + $0x14] sm:$0xf]
    %v452 = vld [vmem:[%s1 + $0x18] sm:$0xf]
    %v453 = vld [vmem:[%s1 + $0x1c] sm:$0xf]
    %v454 = vld [vmem:[%s1 + $0x20] sm:$0xf]
    %v455 = vld [vmem:[%s1 + $0x24] sm:$0xf]
    %v456 = vld [vmem:[%s1 + $0x28] sm:$0xf]
    %v457 = vld [vmem:[%s1 + $0x2c] sm:$0xf]
    %v458 = vld [vmem:[%s1 + $0x30] sm:$0xf]
    %v459 = vld [vmem:[%s1 + $0x34] sm:$0xf]
    %v460 = vld [vmem:[%s1 + $0x38] sm:$0xf]
    %v461 = vld [vmem:[%s1 + $0x3c] sm:$0xf]
    %v462 = vld [vmem:[%s1 + $0x40] sm:$0xf]
    %v463 = vld [vmem:[%s1 + $0x44] sm:$0xf]
    %v464 = vld [vmem:[%s1 + $0x48] sm:$0xf]
    %v465 = vld [vmem:[%s1 + $0x4c] sm:$0xf]
    %v466 = vld [vmem:[%s1 + $0x50] sm:$0xf]
    %v467 = vld [vmem:[%s1 + $0x54] sm:$0xf]
    %v468 = vld [vmem:[%s1 + $0x58] sm:$0xf]
    %v469 = vld [vmem:[%s1 + $0x5c] sm:$0xf]
    %v470 = vld [vmem:[%s1 + $0x60] sm:$0xf]
    %v471 = vld [vmem:[%s1 + $0x64] sm:$0xf]
    %v472 = vld [vmem:[%s1 + $0x68] sm:$0xf]
    %v473 = vld [vmem:[%s1 + $0x6c] sm:$0xf]
    %v474 = vld [vmem:[%s1 + $0x70] sm:$0xf]
    %v475 = vld [vmem:[%s1 + $0x74] sm:$0xf]
    %v476 = vld [vmem:[%s1 + $0x78] sm:$0xf]
    %v477 = vld [vmem:[%s1 + $0x7c] sm:$0xf]
    %v478 = vld [vmem:[%s1 + $0x80] sm:$0xf]
    %v479 = vld [vmem:[%s1 + $0x84] sm:$0xf]
    %v480 = vld [vmem:[%s1 + $0x88] sm:$0xf]
    %v481 = vld [vmem:[%s1 + $0x8c] sm:$0xf]
    %v490 = vcombine.high %v430, %v430
    %v491 = vcombine.high %v432, %v432
    %v492 = vcombine.high %v434, %v434
    %v493 = vcombine.high %v436, %v436
    %v494 = vcombine.high %v438, %v438
    %v495 = vcombine.high %v440, %v440
    %v496 = vcombine.high %v442, %v442
    %v497 = vcombine.high %v444, %v444
    %v506 = vpack.c.bf16 %v430, %v430
    %v507 = vpack.c.bf16 %v490, %v490
    %v508 = vpack.c.bf16 %v431, %v431
    %v509 = vpack.c.bf16 %v432, %v432
    %v510 = vpack.c.bf16 %v491, %v491
    %v511 = vpack.c.bf16 %v433, %v433
    %v512 = vpack.c.bf16 %v434, %v434
    %v513 = vpack.c.bf16 %v492, %v492
    %v514 = vpack.c.bf16 %v435, %v435
    %v515 = vpack.c.bf16 %v436, %v436
    %v516 = vpack.c.bf16 %v493, %v493
    %v517 = vpack.c.bf16 %v437, %v437
    %v518 = vpack.c.bf16 %v438, %v438
    %v519 = vpack.c.bf16 %v494, %v494
    %v520 = vpack.c.bf16 %v439, %v439
    %v521 = vpack.c.bf16 %v440, %v440
    %v522 = vpack.c.bf16 %v495, %v495
    %v523 = vpack.c.bf16 %v441, %v441
    %v524 = vpack.c.bf16 %v442, %v442
    %v525 = vpack.c.bf16 %v496, %v496
    %v526 = vpack.c.bf16 %v443, %v443
    %v527 = vpack.c.bf16 %v444, %v444
    %v528 = vpack.c.bf16 %v497, %v497
    %v529 = vpack.c.bf16 %v445, %v445
    %v554 = vcombine.low %v506, %v507
    %v556 = vunpack.c.l.s4 1983009808
    %v557 = vunpack.c.0.s8 %v556
    %v558 = vlaneseq
    %v559 = vshrl.u32 %v558, 7
    %v560 = vsub.s32 %v557, %v559
    %v561 = vrot.slane %v554, %v560
    %v563 = vunpack.c.l.s4 1983009808
    %v564 = vunpack.c.0.s8 %v563
    %v565 = vlaneseq
    %v566 = vshrl.u32 %v565, 7
    %v567 = vsub.s32 %v564, %v566
    %v568 = vrot.slane %v508, %v567
    %v569 = vcombine.low %v561, %v568
    %v570 = vcombine.low %v509, %v510
    %v572 = vunpack.c.l.s4 1983009808
    %v573 = vunpack.c.0.s8 %v572
    %v574 = vlaneseq
    %v575 = vshrl.u32 %v574, 7
    %v576 = vsub.s32 %v573, %v575
    %v577 = vrot.slane %v570, %v576
    %v579 = vunpack.c.l.s4 1983009808
    %v580 = vunpack.c.0.s8 %v579
    %v581 = vlaneseq
    %v582 = vshrl.u32 %v581, 7
    %v583 = vsub.s32 %v580, %v582
    %v584 = vrot.slane %v511, %v583
    %v585 = vcombine.low %v577, %v584
    %v586 = vcombine.low %v512, %v513
    %v588 = vunpack.c.l.s4 1983009808
    %v589 = vunpack.c.0.s8 %v588
    %v590 = vlaneseq
    %v591 = vshrl.u32 %v590, 7
    %v592 = vsub.s32 %v589, %v591
    %v593 = vrot.slane %v586, %v592
    %v595 = vunpack.c.l.s4 1983009808
    %v596 = vunpack.c.0.s8 %v595
    %v597 = vlaneseq
    %v598 = vshrl.u32 %v597, 7
    %v599 = vsub.s32 %v596, %v598
    %v600 = vrot.slane %v514, %v599
    %v601 = vcombine.low %v593, %v600
    %v602 = vcombine.low %v515, %v516
    %v604 = vunpack.c.l.s4 1983009808
    %v605 = vunpack.c.0.s8 %v604
    %v606 = vlaneseq
    %v607 = vshrl.u32 %v606, 7
    %v608 = vsub.s32 %v605, %v607
    %v609 = vrot.slane %v602, %v608
    %v611 = vunpack.c.l.s4 1983009808
    %v612 = vunpack.c.0.s8 %v611
    %v613 = vlaneseq
    %v614 = vshrl.u32 %v613, 7
    %v615 = vsub.s32 %v612, %v614
    %v616 = vrot.slane %v517, %v615
    %v617 = vcombine.low %v609, %v616
    %v618 = vcombine.low %v518, %v519
    %v620 = vunpack.c.l.s4 1983009808
    %v621 = vunpack.c.0.s8 %v620
    %v622 = vlaneseq
    %v623 = vshrl.u32 %v622, 7
    %v624 = vsub.s32 %v621, %v623
    %v625 = vrot.slane %v618, %v624
    %v627 = vunpack.c.l.s4 1983009808
    %v628 = vunpack.c.0.s8 %v627
    %v629 = vlaneseq
    %v630 = vshrl.u32 %v629, 7
    %v631 = vsub.s32 %v628, %v630
    %v632 = vrot.slane %v520, %v631
    %v633 = vcombine.low %v625, %v632
    %v634 = vcombine.low %v521, %v522
    %v636 = vunpack.c.l.s4 1983009808
    %v637 = vunpack.c.0.s8 %v636
    %v638 = vlaneseq
    %v639 = vshrl.u32 %v638, 7
    %v640 = vsub.s32 %v637, %v639
    %v641 = vrot.slane %v634, %v640
    %v643 = vunpack.c.l.s4 1983009808
    %v644 = vunpack.c.0.s8 %v643
    %v645 = vlaneseq
    %v646 = vshrl.u32 %v645, 7
    %v647 = vsub.s32 %v644, %v646
    %v648 = vrot.slane %v523, %v647
    %v649 = vcombine.low %v641, %v648
    %v650 = vcombine.low %v524, %v525
    %v652 = vunpack.c.l.s4 1983009808
    %v653 = vunpack.c.0.s8 %v652
    %v654 = vlaneseq
    %v655 = vshrl.u32 %v654, 7
    %v656 = vsub.s32 %v653, %v655
    %v657 = vrot.slane %v650, %v656
    %v659 = vunpack.c.l.s4 1983009808
    %v660 = vunpack.c.0.s8 %v659
    %v661 = vlaneseq
    %v662 = vshrl.u32 %v661, 7
    %v663 = vsub.s32 %v660, %v662
    %v664 = vrot.slane %v526, %v663
    %v665 = vcombine.low %v657, %v664
    %v666 = vcombine.low %v527, %v528
    %v668 = vunpack.c.l.s4 1983009808
    %v669 = vunpack.c.0.s8 %v668
    %v670 = vlaneseq
    %v671 = vshrl.u32 %v670, 7
    %v672 = vsub.s32 %v669, %v671
    %v673 = vrot.slane %v666, %v672
    %v675 = vunpack.c.l.s4 1983009808
    %v676 = vunpack.c.0.s8 %v675
    %v677 = vlaneseq
    %v678 = vshrl.u32 %v677, 7
    %v679 = vsub.s32 %v676, %v678
    %v680 = vrot.slane %v529, %v679
    %v681 = vcombine.low %v673, %v680
    %v682 = vcombine.low %v569, %v585
    %v683 = vcombine.high %v569, %v585
    %v684 = vcombine.low %v601, %v617
    %v685 = vcombine.high %v601, %v617
    %v687 = vunpack.c.l.s4 1983009808
    %v688 = vunpack.c.0.s8 %v687
    %v689 = vlaneseq
    %v690 = vshrl.u32 %v689, 7
    %v691 = vsub.s32 %v688, %v690
    %v692 = vrot.slane %v682, %v691
    %v694 = vunpack.c.l.s4 1983009808
    %v695 = vunpack.c.0.s8 %v694
    %v696 = vlaneseq
    %v697 = vshrl.u32 %v696, 7
    %v698 = vsub.s32 %v695, %v697
    %v699 = vrot.slane %v683, %v698
    %v701 = vunpack.c.l.s4 1983009808
    %v702 = vunpack.c.0.s8 %v701
    %v703 = vlaneseq
    %v704 = vshrl.u32 %v703, 7
    %v705 = vsub.s32 %v702, %v704
    %v706 = vrot.slane %v684, %v705
    %v708 = vunpack.c.l.s4 1983009808
    %v709 = vunpack.c.0.s8 %v708
    %v710 = vlaneseq
    %v711 = vshrl.u32 %v710, 7
    %v712 = vsub.s32 %v709, %v711
    %v713 = vrot.slane %v685, %v712
    %v714 = vcombine.low %v692, %v706
    %v715 = vcombine.high %v692, %v706
    %v716 = vcombine.low %v699, %v713
    %v717 = vcombine.low %v633, %v649
    %v718 = vcombine.high %v633, %v649
    %v719 = vcombine.low %v665, %v681
    %v720 = vcombine.high %v665, %v681
    %v722 = vunpack.c.l.s4 1983009808
    %v723 = vunpack.c.0.s8 %v722
    %v724 = vlaneseq
    %v725 = vshrl.u32 %v724, 7
    %v726 = vsub.s32 %v723, %v725
    %v727 = vrot.slane %v717, %v726
    %v729 = vunpack.c.l.s4 1983009808
    %v730 = vunpack.c.0.s8 %v729
    %v731 = vlaneseq
    %v732 = vshrl.u32 %v731, 7
    %v733 = vsub.s32 %v730, %v732
    %v734 = vrot.slane %v718, %v733
    %v736 = vunpack.c.l.s4 1983009808
    %v737 = vunpack.c.0.s8 %v736
    %v738 = vlaneseq
    %v739 = vshrl.u32 %v738, 7
    %v740 = vsub.s32 %v737, %v739
    %v741 = vrot.slane %v719, %v740
    %v743 = vunpack.c.l.s4 1983009808
    %v744 = vunpack.c.0.s8 %v743
    %v745 = vlaneseq
    %v746 = vshrl.u32 %v745, 7
    %v747 = vsub.s32 %v744, %v746
    %v748 = vrot.slane %v720, %v747
    %v749 = vcombine.low %v727, %v741
    %v750 = vcombine.high %v727, %v741
    %v751 = vcombine.low %v734, %v748
    %v792 = vunpack.c.l.b16 %v446
    %v793 = vunpack.c.l.b16 %v447
    %v794 = vunpack.c.l.b16 %v448
    %v795 = vunpack.c.l.b16 %v449
    %v796 = vunpack.c.l.b16 %v450
    %v797 = vunpack.c.l.b16 %v451
    %v798 = vunpack.c.l.b16 %v452
    %v799 = vunpack.c.l.b16 %v453
    %v800 = vunpack.c.l.b16 %v454
    %v801 = vunpack.c.l.b16 %v455
    %v802 = vunpack.c.l.b16 %v456
    %v803 = vunpack.c.l.b16 %v457
    %v804 = vunpack.c.l.b16 %v458
    %v805 = vunpack.c.l.b16 %v459
    %v806 = vunpack.c.l.b16 %v460
    %v807 = vunpack.c.l.b16 %v461
    %v808 = vunpack.c.l.b16 %v462
    %v809 = vunpack.c.l.b16 %v463
    %v810 = vunpack.c.l.b16 %v464
    %v811 = vunpack.c.l.b16 %v465
    %v812 = vunpack.c.l.b16 %v466
    %v813 = vunpack.c.l.b16 %v467
    %v814 = vunpack.c.l.b16 %v468
    %v815 = vunpack.c.l.b16 %v469
    %v816 = vunpack.c.l.b16 %v470
    %v817 = vunpack.c.l.b16 %v471
    %v818 = vunpack.c.l.b16 %v472
    %v819 = vunpack.c.l.b16 %v473
    %v820 = vunpack.c.l.b16 %v474
    %v821 = vunpack.c.l.b16 %v475
    %v822 = vunpack.c.l.b16 %v476
    %v823 = vunpack.c.l.b16 %v477
    %v824 = vunpack.c.l.b16 %v478
    %v825 = vunpack.c.l.b16 %v479
    %v826 = vunpack.c.l.b16 %v480
    %v827 = vunpack.c.l.b16 %v481
    %v828 = vpack.c.b16 %v793, %v792
    %v829 = vpack.c.b16 %v795, %v794
    %v830 = vpack.c.b16 %v797, %v796
    %v831 = vpack.c.b16 %v799, %v798
    %v832 = vpack.c.b16 %v801, %v800
    %v833 = vpack.c.b16 %v803, %v802
    %v834 = vpack.c.b16 %v805, %v804
    %v835 = vpack.c.b16 %v807, %v806
    %v836 = vpack.c.b16 %v809, %v808
    %v837 = vpack.c.b16 %v811, %v810
    %v838 = vpack.c.b16 %v813, %v812
    %v839 = vpack.c.b16 %v815, %v814
    %v840 = vpack.c.b16 %v817, %v816
    %v841 = vpack.c.b16 %v819, %v818
    %v842 = vpack.c.b16 %v821, %v820
    %v843 = vpack.c.b16 %v823, %v822
    %v844 = vpack.c.b16 %v825, %v824
    %v845 = vpack.c.b16 %v827, %v826
    %vm864 = vcmask 261120
    %v866 = vsel %vm864, %v716, 0
    %v869 = vsel %vm864, %v751, 0
    %871 = vmatprep.subr.bf16.mxu0 0
    %872 = vmatpush1.bf16.msra.mxu0 %v835
    %873 = vmatprep.subr.bf16.mxu0 0
    %874 = vmatpush1.bf16.msra.mxu0 %v834
    %875 = vmatprep.subr.bf16.mxu0 0
    %876 = vmatpush1.bf16.msra.mxu0 %v833
    %877 = vmatprep.subr.bf16.mxu0 0
    %878 = vmatpush1.bf16.msra.mxu0 %v832
    %879 = vmatprep.subr.bf16.mxu0 0
    %880 = vmatpush1.bf16.msra.mxu0 %v831
    %881 = vmatprep.subr.bf16.mxu0 0
    %882 = vmatpush1.bf16.msra.mxu0 %v830
    %883 = vmatprep.subr.bf16.mxu0 0
    %884 = vmatpush1.bf16.msra.mxu0 %v829
    %885 = vmatprep.subr.bf16.mxu0 0
    %886 = vmatpush1.bf16.msra.mxu0 %v828
    %887 = vmatprep.subr.bf16.mxu0 0
    %888 = vmatpush2.bf16.msra.mxu0 %v843
    %889 = vmatprep.subr.bf16.mxu0 0
    %890 = vmatpush2.bf16.msra.mxu0 %v842
    %891 = vmatprep.subr.bf16.mxu0 0
    %892 = vmatpush2.bf16.msra.mxu0 %v841
    %893 = vmatprep.subr.bf16.mxu0 0
    %894 = vmatpush2.bf16.msra.mxu0 %v840
    %895 = vmatprep.subr.bf16.mxu0 0
    %896 = vmatpush2.bf16.msra.mxu0 %v839
    %897 = vmatprep.subr.bf16.mxu0 0
    %898 = vmatpush2.bf16.msra.mxu0 %v838
    %899 = vmatprep.subr.bf16.mxu0 0
    %900 = vmatpush2.bf16.msra.mxu0 %v837
    %901 = vmatprep.subr.bf16.mxu0 0
    %902 = vmatpush2.bf16.msra.mxu0 %v836
    %903 = vmatprep.mubr.bf16.mxu0 %v715
    %904 = vmatmul.mubr.bf16.gmra.mxu0 %v714
    %v905 = vpop.f32.mrf.mxu0
    %v906 = vadd.f32 0.0, %v905
    %v907 = vpop.f32.mrf.mxu0
    %v908 = vpop.f32.mrf.mxu0
    %v909 = vadd.f32 0.0, %v908
    %v910 = vpop.f32.mrf.mxu0
    %911 = vmatprep.mubr.bf16.mxu0 %v750
    %912 = vmatmul.mubr.bf16.gmra.mxu0 %v749
    %v913 = vpop.f32.mrf.mxu0
    %v914 = vadd.f32 0.0, %v913
    %v915 = vpop.f32.mrf.mxu0
    %v916 = vpop.f32.mrf.mxu0
    %v917 = vadd.f32 0.0, %v916
    %v918 = vpop.f32.mrf.mxu0
    %919 = vdwg.mxu0
    %920 = vmatprep.subr.bf16.mxu0 0
    %921 = vmatpush1.bf16.msra.mxu0 0
    %922 = vmatprep.subr.bf16.mxu0 0
    %923 = vmatpush1.bf16.msra.mxu0 0
    %924 = vmatprep.subr.bf16.mxu0 0
    %925 = vmatpush1.bf16.msra.mxu0 0
    %926 = vmatprep.subr.bf16.mxu0 0
    %927 = vmatpush1.bf16.msra.mxu0 0
    %928 = vmatprep.subr.bf16.mxu0 0
    %929 = vmatpush1.bf16.msra.mxu0 0
    %930 = vmatprep.subr.bf16.mxu0 0
    %931 = vmatpush1.bf16.msra.mxu0 0
    %932 = vmatprep.subr.bf16.mxu0 0
    %933 = vmatpush1.bf16.msra.mxu0 %v845
    %934 = vmatprep.subr.bf16.mxu0 0
    %935 = vmatpush1.bf16.msra.mxu0 %v844
    %936 = vmatprep.subr.bf16.mxu0 0
    %937 = vmatpush2.bf16.msra.mxu0 0
    %938 = vmatprep.subr.bf16.mxu0 0
    %939 = vmatpush2.bf16.msra.mxu0 0
    %940 = vmatprep.subr.bf16.mxu0 0
    %941 = vmatpush2.bf16.msra.mxu0 0
    %942 = vmatprep.subr.bf16.mxu0 0
    %943 = vmatpush2.bf16.msra.mxu0 0
    %944 = vmatprep.subr.bf16.mxu0 0
    %945 = vmatpush2.bf16.msra.mxu0 0
    %946 = vmatprep.subr.bf16.mxu0 0
    %947 = vmatpush2.bf16.msra.mxu0 0
    %948 = vmatprep.subr.bf16.mxu0 0
    %949 = vmatpush2.bf16.msra.mxu0 0
    %950 = vmatprep.subr.bf16.mxu0 0
    %951 = vmatpush2.bf16.msra.mxu0 0
    %952 = vmatprep.mubr.bf16.mxu0 0
    %953 = vmatmul.mubr.bf16.gmra.mxu0 %v866
    %v954 = vpop.f32.mrf.mxu0
    %v955 = vadd.f32 %v906, %v954
    %v956 = vpop.f32.mrf.mxu0
    %v957 = vpop.f32.mrf.mxu0
    %v958 = vadd.f32 %v909, %v957
    %v959 = vpop.f32.mrf.mxu0
    %960 = vmatprep.mubr.bf16.mxu0 0
    %961 = vmatmul.mubr.bf16.gmra.mxu0 %v869
    %v962 = vpop.f32.mrf.mxu0
    %v963 = vadd.f32 %v914, %v962
    %v964 = vpop.f32.mrf.mxu0
    %v965 = vpop.f32.mrf.mxu0
    %v966 = vadd.f32 %v917, %v965
    %v967 = vpop.f32.mrf.mxu0
    %968 = vdwg.mxu0
    %v973 = vcombine.high %v955, %v955
    %v974 = vcombine.high %v958, %v958
    %v975 = vcombine.high %v963, %v963
    %v976 = vcombine.high %v966, %v966
    %v981 = vld [vmem:[%s2] sm:$0x1]
    %v982 = vld [vmem:[%s3] sm:$0x1]
    %v983 = vsel %vm37, %v955, 0.0
    %v984 = vsel %vm37, %v973, 0.0
    %v985 = vadd.f32 %v983, %v984
    %v986 = vsel %vm37, %v958, 0.0
    %v987 = vadd.f32 %v985, %v986
    %v988 = vsel %vm37, %v974, 0.0
    %v989 = vadd.f32 %v987, %v988
    %v990 = vsel %vm37, %v963, 0.0
    %v991 = vadd.f32 %v989, %v990
    %v992 = vsel %vm37, %v975, 0.0
    %v993 = vadd.f32 %v991, %v992
    %v994 = vsel %vm37, %v966, 0.0
    %v995 = vadd.f32 %v993, %v994
    %v996 = vsel %vm37, %v976, 0.0
    %v997 = vadd.f32 %v995, %v996
    %v998 = vrot.slane %v997, 4
    %v999 = vadd.f32 %v997, %v998
    %v1000 = vrot.slane %v999, 2
    %v1001 = vadd.f32 %v999, %v1000
    %v1002 = vrot.slane %v1001, 1
    %v1003 = vadd.f32 %v1001, %v1002
    %v1004 = vmul.f32 %v955, %v955
    %v1005 = vmul.f32 %v973, %v973
    %v1006 = vmul.f32 %v958, %v958
    %v1007 = vmul.f32 %v974, %v974
    %v1008 = vmul.f32 %v963, %v963
    %v1009 = vmul.f32 %v975, %v975
    %v1010 = vmul.f32 %v966, %v966
    %v1011 = vmul.f32 %v976, %v976
    %v1012 = vsel %vm37, %v1004, 0.0
    %v1013 = vsel %vm37, %v1005, 0.0
    %v1014 = vadd.f32 %v1012, %v1013
    %v1015 = vsel %vm37, %v1006, 0.0
    %v1016 = vadd.f32 %v1014, %v1015
    %v1017 = vsel %vm37, %v1007, 0.0
    %v1018 = vadd.f32 %v1016, %v1017
    %v1019 = vsel %vm37, %v1008, 0.0
    %v1020 = vadd.f32 %v1018, %v1019
    %v1021 = vsel %vm37, %v1009, 0.0
    %v1022 = vadd.f32 %v1020, %v1021
    %v1023 = vsel %vm37, %v1010, 0.0
    %v1024 = vadd.f32 %v1022, %v1023
    %v1025 = vsel %vm37, %v1011, 0.0
    %v1026 = vadd.f32 %v1024, %v1025
    %v1027 = vrot.slane %v1026, 4
    %v1028 = vadd.f32 %v1026, %v1027
    %v1029 = vrot.slane %v1028, 2
    %v1030 = vadd.f32 %v1028, %v1029
    %v1031 = vrot.slane %v1030, 1
    %v1032 = vadd.f32 %v1030, %v1031
    %v1033 = vmul.f32 %v1003, 0.03125
    %v1034 = vmul.f32 %v1032, 0.03125
    %v1035 = vmul.f32 %v1033, %v1033
    %v1036 = vsub.f32 %v1034, %v1035
    %v1037 = vadd.f32 %v1036, 1e-05
    %v1038 = vrsqrt.pop %v1037
    %v1039 = vsub.f32 %v955, %v1033
    %v1040 = vsub.f32 %v973, %v1033
    %v1041 = vsub.f32 %v958, %v1033
    %v1042 = vsub.f32 %v974, %v1033
    %v1043 = vsub.f32 %v963, %v1033
    %v1044 = vsub.f32 %v975, %v1033
    %v1045 = vsub.f32 %v966, %v1033
    %v1046 = vsub.f32 %v976, %v1033
    %v1047 = vmul.f32 %v1038, %v981
    %v1048 = vlaneseq
    %v1049 = vshrl.u32 %v1048, 7
    %v1050 = vsub.s32 0, %v1049
    %v1051 = vrot.slane %v1047, %v1050
    %v1052 = vmul.f32 %v1039, %v1051
    %v1053 = vmul.f32 %v1040, %v1051
    %v1054 = vmul.f32 %v1041, %v1051
    %v1055 = vmul.f32 %v1042, %v1051
    %v1056 = vmul.f32 %v1043, %v1051
    %v1057 = vmul.f32 %v1044, %v1051
    %v1058 = vmul.f32 %v1045, %v1051
    %v1059 = vmul.f32 %v1046, %v1051
    %v1061 = vlaneseq
    %v1062 = vshrl.u32 %v1061, 7
    %v1063 = vsub.s32 0, %v1062
    %v1064 = vrot.slane %v982, %v1063
    %v1066 = vadd.f32 %v1052, %v1064
    %v1067 = vadd.f32 %v1053, %v1064
    %v1068 = vadd.f32 %v1054, %v1064
    %v1069 = vadd.f32 %v1055, %v1064
    %v1070 = vadd.f32 %v1056, %v1064
    %v1071 = vadd.f32 %v1057, %v1064
    %v1072 = vadd.f32 %v1058, %v1064
    %v1073 = vadd.f32 %v1059, %v1064
    %v1074 = vmax.f32 %v1066, 0.0
    %v1075 = vmax.f32 %v1067, 0.0
    %v1076 = vmax.f32 %v1068, 0.0
    %v1077 = vmax.f32 %v1069, 0.0
    %v1078 = vmax.f32 %v1070, 0.0
    %v1079 = vmax.f32 %v1071, 0.0
    %v1080 = vmax.f32 %v1072, 0.0
    %v1081 = vmax.f32 %v1073, 0.0
    %s1082 = scalar_lea.vmem [#allocation4], 8
    %1083 = vst.msk [vmem:[%s1082 + $0x1] sm:$0xf] %vm37, %v1074
    %1084 = vst.msk [vmem:[%s1082 + $0x9] sm:$0xf] %vm37, %v1075
    %1085 = vst.msk [vmem:[%s1082 + $0x11] sm:$0xf] %vm37, %v1076
    %1086 = vst.msk [vmem:[%s1082 + $0x19] sm:$0xf] %vm37, %v1077
    %1087 = vst.msk [vmem:[%s1082 + $0x31] sm:$0xf] %vm37, %v1078
    %1088 = vst.msk [vmem:[%s1082 + $0x39] sm:$0xf] %vm37, %v1079
    %1089 = vst.msk [vmem:[%s1082 + $0x41] sm:$0xf] %vm37, %v1080
    %1090 = vst.msk [vmem:[%s1082 + $0x49] sm:$0xf] %vm37, %v1081
    %v1091 = vld [vmem:[%s1082 + $0x2] sm:$0x1]
    %v1092 = vld [vmem:[%s1082 + $0xa] sm:$0x1]
    %v1093 = vld [vmem:[%s1082 + $0x12] sm:$0x1]
    %v1094 = vld [vmem:[%s1082 + $0x1a] sm:$0x1]
    %v1095 = vld [vmem:[%s1082 + $0x32] sm:$0x1]
    %v1096 = vld [vmem:[%s1082 + $0x3a] sm:$0x1]
    %v1097 = vld [vmem:[%s1082 + $0x42] sm:$0x1]
    %v1098 = vld [vmem:[%s1082 + $0x4a] sm:$0x1]
    %1099 = vst.msk [vmem:[%s1082] sm:$0x1] %vm54, %v1091
    %1100 = vst.msk [vmem:[%s1082 + $0x8] sm:$0x1] %vm54, %v1092
    %1101 = vst.msk [vmem:[%s1082 + $0x10] sm:$0x1] %vm54, %v1093
    %1102 = vst.msk [vmem:[%s1082 + $0x18] sm:$0x1] %vm54, %v1094
    %1103 = vst.msk [vmem:[%s1082 + $0x30] sm:$0x1] %vm54, %v1095
    %1104 = vst.msk [vmem:[%s1082 + $0x38] sm:$0x1] %vm54, %v1096
    %1105 = vst.msk [vmem:[%s1082 + $0x40] sm:$0x1] %vm54, %v1097
    %1106 = vst.msk [vmem:[%s1082 + $0x48] sm:$0x1] %vm54, %v1098
    %v1107 = vld [vmem:[%s1082 + $0x3] sm:$0x1]
    %v1108 = vld [vmem:[%s1082 + $0xb] sm:$0x1]
    %v1109 = vld [vmem:[%s1082 + $0x13] sm:$0x1]
    %v1110 = vld [vmem:[%s1082 + $0x1b] sm:$0x1]
    %v1111 = vld [vmem:[%s1082 + $0x33] sm:$0x1]
    %v1112 = vld [vmem:[%s1082 + $0x3b] sm:$0x1]
    %v1113 = vld [vmem:[%s1082 + $0x43] sm:$0x1]
    %v1114 = vld [vmem:[%s1082 + $0x4b] sm:$0x1]
    %1115 = vst.msk [vmem:[%s1082 + $0x5] sm:$0x1] %vm54, %v1107
    %1116 = vst.msk [vmem:[%s1082 + $0xd] sm:$0x1] %vm54, %v1108
    %1117 = vst.msk [vmem:[%s1082 + $0x15] sm:$0x1] %vm54, %v1109
    %1118 = vst.msk [vmem:[%s1082 + $0x1d] sm:$0x1] %vm54, %v1110
    %1119 = vst.msk [vmem:[%s1082 + $0x35] sm:$0x1] %vm54, %v1111
    %1120 = vst.msk [vmem:[%s1082 + $0x3d] sm:$0x1] %vm54, %v1112
    %1121 = vst.msk [vmem:[%s1082 + $0x45] sm:$0x1] %vm54, %v1113
    %1122 = vst.msk [vmem:[%s1082 + $0x4d] sm:$0x1] %vm54, %v1114
    %s1123 = scalar_lea.vmem [#allocation4], 16
    %v1124 = vld [vmem:[%s1123] sm:$0x3f]
    %v1125 = vld [vmem:[%s1123 + $0x30] sm:$0x3f]
    %1126 = vst.msk [vmem:[#allocation4] sm:$0x3f] %vm82, %v1124
    %1127 = vst.msk [vmem:[#allocation4 + $0x30] sm:$0x3f] %vm82, %v1125
    %s1128 = scalar_lea.vmem [#allocation4], 24
    %v1129 = vld [vmem:[%s1128] sm:$0x3f]
    %v1130 = vld [vmem:[%s1128 + $0x30] sm:$0x3f]
    %s1131 = scalar_lea.vmem [#allocation4], 40
    %1132 = vst.msk [vmem:[%s1131] sm:$0x3f] %vm82, %v1129
    %1133 = vst.msk [vmem:[%s1131 + $0x30] sm:$0x3f] %vm82, %v1130
    %v1134 = vld [vmem:[#allocation4] sm:$0xf]
    %v1135 = vld [vmem:[#allocation4 + $0x8] sm:$0xf]
    %v1136 = vld [vmem:[#allocation4 + $0x10] sm:$0xf]
    %v1137 = vld [vmem:[#allocation4 + $0x18] sm:$0xf]
    %v1138 = vld [vmem:[#allocation4 + $0x30] sm:$0xf]
    %v1139 = vld [vmem:[#allocation4 + $0x38] sm:$0xf]
    %v1140 = vld [vmem:[#allocation4 + $0x40] sm:$0xf]
    %v1141 = vld [vmem:[#allocation4 + $0x48] sm:$0xf]
    %1142 = vst.msk [vmem:[#allocation5] sm:$0xf] %vm37, %v1134
    %1143 = vst.msk [vmem:[#allocation5 + $0xc] sm:$0xf] %vm37, %v1135
    %1144 = vst.msk [vmem:[#allocation5 + $0x18] sm:$0xf] %vm37, %v1136
    %1145 = vst.msk [vmem:[#allocation5 + $0x24] sm:$0xf] %vm37, %v1137
    %1146 = vst.msk [vmem:[#allocation5 + $0x30] sm:$0xf] %vm37, %v1138
    %1147 = vst.msk [vmem:[#allocation5 + $0x3c] sm:$0xf] %vm37, %v1139
    %1148 = vst.msk [vmem:[#allocation5 + $0x48] sm:$0xf] %vm37, %v1140
    %1149 = vst.msk [vmem:[#allocation5 + $0x54] sm:$0xf] %vm37, %v1141
    %v1150 = vld [vmem:[#allocation4 + $0x1] sm:$0xf]
    %v1151 = vld [vmem:[#allocation4 + $0x9] sm:$0xf]
    %v1152 = vld [vmem:[#allocation4 + $0x11] sm:$0xf]
    %v1153 = vld [vmem:[#allocation4 + $0x19] sm:$0xf]
    %v1154 = vld [vmem:[#allocation4 + $0x31] sm:$0xf]
    %v1155 = vld [vmem:[#allocation4 + $0x39] sm:$0xf]
    %v1156 = vld [vmem:[#allocation4 + $0x41] sm:$0xf]
    %v1157 = vld [vmem:[#allocation4 + $0x49] sm:$0xf]
    %1166 = vrot.lane.b32.xlu0 %v1150, 32
    %v1167 = vpop.permute.xlu0 %1166
    %1168 = vrot.lane.b32.xlu0 %v1151, 32
    %v1169 = vpop.permute.xlu0 %1168
    %1170 = vrot.lane.b32.xlu0 %v1152, 32
    %v1171 = vpop.permute.xlu0 %1170
    %1172 = vrot.lane.b32.xlu0 %v1153, 32
    %v1173 = vpop.permute.xlu0 %1172
    %1174 = vrot.lane.b32.xlu0 %v1154, 32
    %v1175 = vpop.permute.xlu0 %1174
    %1176 = vrot.lane.b32.xlu0 %v1155, 32
    %v1177 = vpop.permute.xlu0 %1176
    %1178 = vrot.lane.b32.xlu0 %v1156, 32
    %v1179 = vpop.permute.xlu0 %1178
    %1180 = vrot.lane.b32.xlu0 %v1157, 32
    %v1181 = vpop.permute.xlu0 %1180
    %1190 = vst.msk [vmem:[#allocation5] sm:$0xf] %vm147, %v1167
    %1191 = vst.msk [vmem:[#allocation5 + $0xc] sm:$0xf] %vm147, %v1169
    %1192 = vst.msk [vmem:[#allocation5 + $0x18] sm:$0xf] %vm147, %v1171
    %1193 = vst.msk [vmem:[#allocation5 + $0x24] sm:$0xf] %vm147, %v1173
    %1194 = vst.msk [vmem:[#allocation5 + $0x30] sm:$0xf] %vm147, %v1175
    %1195 = vst.msk [vmem:[#allocation5 + $0x3c] sm:$0xf] %vm147, %v1177
    %1196 = vst.msk [vmem:[#allocation5 + $0x48] sm:$0xf] %vm147, %v1179
    %1197 = vst.msk [vmem:[#allocation5 + $0x54] sm:$0xf] %vm147, %v1181
    %v1198 = vld [vmem:[#allocation4 + $0x2] sm:$0xf]
    %v1199 = vld [vmem:[#allocation4 + $0xa] sm:$0xf]
    %v1200 = vld [vmem:[#allocation4 + $0x12] sm:$0xf]
    %v1201 = vld [vmem:[#allocation4 + $0x1a] sm:$0xf]
    %v1202 = vld [vmem:[#allocation4 + $0x32] sm:$0xf]
    %v1203 = vld [vmem:[#allocation4 + $0x3a] sm:$0xf]
    %v1204 = vld [vmem:[#allocation4 + $0x42] sm:$0xf]
    %v1205 = vld [vmem:[#allocation4 + $0x4a] sm:$0xf]
    %1214 = vrot.lane.b32.xlu0 %v1198, 64
    %v1215 = vpop.permute.xlu0 %1214
    %1216 = vrot.lane.b32.xlu0 %v1199, 64
    %v1217 = vpop.permute.xlu0 %1216
    %1218 = vrot.lane.b32.xlu0 %v1200, 64
    %v1219 = vpop.permute.xlu0 %1218
    %1220 = vrot.lane.b32.xlu0 %v1201, 64
    %v1221 = vpop.permute.xlu0 %1220
    %1222 = vrot.lane.b32.xlu0 %v1202, 64
    %v1223 = vpop.permute.xlu0 %1222
    %1224 = vrot.lane.b32.xlu0 %v1203, 64
    %v1225 = vpop.permute.xlu0 %1224
    %1226 = vrot.lane.b32.xlu0 %v1204, 64
    %v1227 = vpop.permute.xlu0 %1226
    %1228 = vrot.lane.b32.xlu0 %v1205, 64
    %v1229 = vpop.permute.xlu0 %1228
    %1238 = vst.msk [vmem:[#allocation5] sm:$0xf] %vm196, %v1215
    %1239 = vst.msk [vmem:[#allocation5 + $0xc] sm:$0xf] %vm196, %v1217
    %1240 = vst.msk [vmem:[#allocation5 + $0x18] sm:$0xf] %vm196, %v1219
    %1241 = vst.msk [vmem:[#allocation5 + $0x24] sm:$0xf] %vm196, %v1221
    %1242 = vst.msk [vmem:[#allocation5 + $0x30] sm:$0xf] %vm196, %v1223
    %1243 = vst.msk [vmem:[#allocation5 + $0x3c] sm:$0xf] %vm196, %v1225
    %1244 = vst.msk [vmem:[#allocation5 + $0x48] sm:$0xf] %vm196, %v1227
    %1245 = vst.msk [vmem:[#allocation5 + $0x54] sm:$0xf] %vm196, %v1229
    %v1246 = vld [vmem:[%s1082] sm:$0xf]
    %v1247 = vld [vmem:[%s1082 + $0x8] sm:$0xf]
    %v1248 = vld [vmem:[%s1082 + $0x10] sm:$0xf]
    %v1249 = vld [vmem:[%s1082 + $0x18] sm:$0xf]
    %v1250 = vld [vmem:[%s1082 + $0x30] sm:$0xf]
    %v1251 = vld [vmem:[%s1082 + $0x38] sm:$0xf]
    %v1252 = vld [vmem:[%s1082 + $0x40] sm:$0xf]
    %v1253 = vld [vmem:[%s1082 + $0x48] sm:$0xf]
    %1262 = vrot.lane.b32.xlu0 %v1246, 96
    %v1263 = vpop.permute.xlu0 %1262
    %1264 = vrot.lane.b32.xlu0 %v1247, 96
    %v1265 = vpop.permute.xlu0 %1264
    %1266 = vrot.lane.b32.xlu0 %v1248, 96
    %v1267 = vpop.permute.xlu0 %1266
    %1268 = vrot.lane.b32.xlu0 %v1249, 96
    %v1269 = vpop.permute.xlu0 %1268
    %1270 = vrot.lane.b32.xlu0 %v1250, 96
    %v1271 = vpop.permute.xlu0 %1270
    %1272 = vrot.lane.b32.xlu0 %v1251, 96
    %v1273 = vpop.permute.xlu0 %1272
    %1274 = vrot.lane.b32.xlu0 %v1252, 96
    %v1275 = vpop.permute.xlu0 %1274
    %1276 = vrot.lane.b32.xlu0 %v1253, 96
    %v1277 = vpop.permute.xlu0 %1276
    %1286 = vst.msk [vmem:[#allocation5] sm:$0xf] %vm245, %v1263
    %1287 = vst.msk [vmem:[#allocation5 + $0xc] sm:$0xf] %vm245, %v1265
    %1288 = vst.msk [vmem:[#allocation5 + $0x18] sm:$0xf] %vm245, %v1267
    %1289 = vst.msk [vmem:[#allocation5 + $0x24] sm:$0xf] %vm245, %v1269
    %1290 = vst.msk [vmem:[#allocation5 + $0x30] sm:$0xf] %vm245, %v1271
    %1291 = vst.msk [vmem:[#allocation5 + $0x3c] sm:$0xf] %vm245, %v1273
    %1292 = vst.msk [vmem:[#allocation5 + $0x48] sm:$0xf] %vm245, %v1275
    %1293 = vst.msk [vmem:[#allocation5 + $0x54] sm:$0xf] %vm245, %v1277
    %v1294 = vld [vmem:[%s1082 + $0x1] sm:$0xf]
    %v1295 = vld [vmem:[%s1082 + $0x9] sm:$0xf]
    %v1296 = vld [vmem:[%s1082 + $0x11] sm:$0xf]
    %v1297 = vld [vmem:[%s1082 + $0x19] sm:$0xf]
    %v1298 = vld [vmem:[%s1082 + $0x31] sm:$0xf]
    %v1299 = vld [vmem:[%s1082 + $0x39] sm:$0xf]
    %v1300 = vld [vmem:[%s1082 + $0x41] sm:$0xf]
    %v1301 = vld [vmem:[%s1082 + $0x49] sm:$0xf]
    %1302 = vst.msk [vmem:[#allocation5 + $0x4] sm:$0xf] %vm37, %v1294
    %1303 = vst.msk [vmem:[#allocation5 + $0x10] sm:$0xf] %vm37, %v1295
    %1304 = vst.msk [vmem:[#allocation5 + $0x1c] sm:$0xf] %vm37, %v1296
    %1305 = vst.msk [vmem:[#allocation5 + $0x28] sm:$0xf] %vm37, %v1297
    %1306 = vst.msk [vmem:[#allocation5 + $0x34] sm:$0xf] %vm37, %v1298
    %1307 = vst.msk [vmem:[#allocation5 + $0x40] sm:$0xf] %vm37, %v1299
    %1308 = vst.msk [vmem:[#allocation5 + $0x4c] sm:$0xf] %vm37, %v1300
    %1309 = vst.msk [vmem:[#allocation5 + $0x58] sm:$0xf] %vm37, %v1301
    %v1310 = vld [vmem:[%s1082 + $0x2] sm:$0xf]
    %v1311 = vld [vmem:[%s1082 + $0xa] sm:$0xf]
    %v1312 = vld [vmem:[%s1082 + $0x12] sm:$0xf]
    %v1313 = vld [vmem:[%s1082 + $0x1a] sm:$0xf]
    %v1314 = vld [vmem:[%s1082 + $0x32] sm:$0xf]
    %v1315 = vld [vmem:[%s1082 + $0x3a] sm:$0xf]
    %v1316 = vld [vmem:[%s1082 + $0x42] sm:$0xf]
    %v1317 = vld [vmem:[%s1082 + $0x4a] sm:$0xf]
    %1326 = vrot.lane.b32.xlu0 %v1310, 32
    %v1327 = vpop.permute.xlu0 %1326
    %1328 = vrot.lane.b32.xlu0 %v1311, 32
    %v1329 = vpop.permute.xlu0 %1328
    %1330 = vrot.lane.b32.xlu0 %v1312, 32
    %v1331 = vpop.permute.xlu0 %1330
    %1332 = vrot.lane.b32.xlu0 %v1313, 32
    %v1333 = vpop.permute.xlu0 %1332
    %1334 = vrot.lane.b32.xlu0 %v1314, 32
    %v1335 = vpop.permute.xlu0 %1334
    %1336 = vrot.lane.b32.xlu0 %v1315, 32
    %v1337 = vpop.permute.xlu0 %1336
    %1338 = vrot.lane.b32.xlu0 %v1316, 32
    %v1339 = vpop.permute.xlu0 %1338
    %1340 = vrot.lane.b32.xlu0 %v1317, 32
    %v1341 = vpop.permute.xlu0 %1340
    %1350 = vst.msk [vmem:[#allocation5 + $0x4] sm:$0xf] %vm147, %v1327
    %1351 = vst.msk [vmem:[#allocation5 + $0x10] sm:$0xf] %vm147, %v1329
    %1352 = vst.msk [vmem:[#allocation5 + $0x1c] sm:$0xf] %vm147, %v1331
    %1353 = vst.msk [vmem:[#allocation5 + $0x28] sm:$0xf] %vm147, %v1333
    %1354 = vst.msk [vmem:[#allocation5 + $0x34] sm:$0xf] %vm147, %v1335
    %1355 = vst.msk [vmem:[#allocation5 + $0x40] sm:$0xf] %vm147, %v1337
    %1356 = vst.msk [vmem:[#allocation5 + $0x4c] sm:$0xf] %vm147, %v1339
    %1357 = vst.msk [vmem:[#allocation5 + $0x58] sm:$0xf] %vm147, %v1341
    %v1358 = vld [vmem:[%s1123] sm:$0xf]
    %v1359 = vld [vmem:[%s1123 + $0x8] sm:$0xf]
    %v1360 = vld [vmem:[%s1123 + $0x10] sm:$0xf]
    %v1361 = vld [vmem:[%s1123 + $0x18] sm:$0xf]
    %v1362 = vld [vmem:[%s1123 + $0x30] sm:$0xf]
    %v1363 = vld [vmem:[%s1123 + $0x38] sm:$0xf]
    %v1364 = vld [vmem:[%s1123 + $0x40] sm:$0xf]
    %v1365 = vld [vmem:[%s1123 + $0x48] sm:$0xf]
    %1374 = vrot.lane.b32.xlu0 %v1358, 64
    %v1375 = vpop.permute.xlu0 %1374
    %1376 = vrot.lane.b32.xlu0 %v1359, 64
    %v1377 = vpop.permute.xlu0 %1376
    %1378 = vrot.lane.b32.xlu0 %v1360, 64
    %v1379 = vpop.permute.xlu0 %1378
    %1380 = vrot.lane.b32.xlu0 %v1361, 64
    %v1381 = vpop.permute.xlu0 %1380
    %1382 = vrot.lane.b32.xlu0 %v1362, 64
    %v1383 = vpop.permute.xlu0 %1382
    %1384 = vrot.lane.b32.xlu0 %v1363, 64
    %v1385 = vpop.permute.xlu0 %1384
    %1386 = vrot.lane.b32.xlu0 %v1364, 64
    %v1387 = vpop.permute.xlu0 %1386
    %1388 = vrot.lane.b32.xlu0 %v1365, 64
    %v1389 = vpop.permute.xlu0 %1388
    %1398 = vst.msk [vmem:[#allocation5 + $0x4] sm:$0xf] %vm196, %v1375
    %1399 = vst.msk [vmem:[#allocation5 + $0x10] sm:$0xf] %vm196, %v1377
    %1400 = vst.msk [vmem:[#allocation5 + $0x1c] sm:$0xf] %vm196, %v1379
    %1401 = vst.msk [vmem:[#allocation5 + $0x28] sm:$0xf] %vm196, %v1381
    %1402 = vst.msk [vmem:[#allocation5 + $0x34] sm:$0xf] %vm196, %v1383
    %1403 = vst.msk [vmem:[#allocation5 + $0x40] sm:$0xf] %vm196, %v1385
    %1404 = vst.msk [vmem:[#allocation5 + $0x4c] sm:$0xf] %vm196, %v1387
    %1405 = vst.msk [vmem:[#allocation5 + $0x58] sm:$0xf] %vm196, %v1389
    %v1406 = vld [vmem:[%s1123 + $0x1] sm:$0xf]
    %v1407 = vld [vmem:[%s1123 + $0x9] sm:$0xf]
    %v1408 = vld [vmem:[%s1123 + $0x11] sm:$0xf]
    %v1409 = vld [vmem:[%s1123 + $0x19] sm:$0xf]
    %v1410 = vld [vmem:[%s1123 + $0x31] sm:$0xf]
    %v1411 = vld [vmem:[%s1123 + $0x39] sm:$0xf]
    %v1412 = vld [vmem:[%s1123 + $0x41] sm:$0xf]
    %v1413 = vld [vmem:[%s1123 + $0x49] sm:$0xf]
    %1422 = vrot.lane.b32.xlu0 %v1406, 96
    %v1423 = vpop.permute.xlu0 %1422
    %1424 = vrot.lane.b32.xlu0 %v1407, 96
    %v1425 = vpop.permute.xlu0 %1424
    %1426 = vrot.lane.b32.xlu0 %v1408, 96
    %v1427 = vpop.permute.xlu0 %1426
    %1428 = vrot.lane.b32.xlu0 %v1409, 96
    %v1429 = vpop.permute.xlu0 %1428
    %1430 = vrot.lane.b32.xlu0 %v1410, 96
    %v1431 = vpop.permute.xlu0 %1430
    %1432 = vrot.lane.b32.xlu0 %v1411, 96
    %v1433 = vpop.permute.xlu0 %1432
    %1434 = vrot.lane.b32.xlu0 %v1412, 96
    %v1435 = vpop.permute.xlu0 %1434
    %1436 = vrot.lane.b32.xlu0 %v1413, 96
    %v1437 = vpop.permute.xlu0 %1436
    %1446 = vst.msk [vmem:[#allocation5 + $0x4] sm:$0xf] %vm245, %v1423
    %1447 = vst.msk [vmem:[#allocation5 + $0x10] sm:$0xf] %vm245, %v1425
    %1448 = vst.msk [vmem:[#allocation5 + $0x1c] sm:$0xf] %vm245, %v1427
    %1449 = vst.msk [vmem:[#allocation5 + $0x28] sm:$0xf] %vm245, %v1429
    %1450 = vst.msk [vmem:[#allocation5 + $0x34] sm:$0xf] %vm245, %v1431
    %1451 = vst.msk [vmem:[#allocation5 + $0x40] sm:$0xf] %vm245, %v1433
    %1452 = vst.msk [vmem:[#allocation5 + $0x4c] sm:$0xf] %vm245, %v1435
    %1453 = vst.msk [vmem:[#allocation5 + $0x58] sm:$0xf] %vm245, %v1437
    %v1454 = vld [vmem:[%s1123 + $0x2] sm:$0xf]
    %v1455 = vld [vmem:[%s1123 + $0xa] sm:$0xf]
    %v1456 = vld [vmem:[%s1123 + $0x12] sm:$0xf]
    %v1457 = vld [vmem:[%s1123 + $0x1a] sm:$0xf]
    %v1458 = vld [vmem:[%s1123 + $0x32] sm:$0xf]
    %v1459 = vld [vmem:[%s1123 + $0x3a] sm:$0xf]
    %v1460 = vld [vmem:[%s1123 + $0x42] sm:$0xf]
    %v1461 = vld [vmem:[%s1123 + $0x4a] sm:$0xf]
    %1462 = vst.msk [vmem:[#allocation5 + $0x8] sm:$0xf] %vm37, %v1454
    %1463 = vst.msk [vmem:[#allocation5 + $0x14] sm:$0xf] %vm37, %v1455
    %1464 = vst.msk [vmem:[#allocation5 + $0x20] sm:$0xf] %vm37, %v1456
    %1465 = vst.msk [vmem:[#allocation5 + $0x2c] sm:$0xf] %vm37, %v1457
    %1466 = vst.msk [vmem:[#allocation5 + $0x38] sm:$0xf] %vm37, %v1458
    %1467 = vst.msk [vmem:[#allocation5 + $0x44] sm:$0xf] %vm37, %v1459
    %1468 = vst.msk [vmem:[#allocation5 + $0x50] sm:$0xf] %vm37, %v1460
    %1469 = vst.msk [vmem:[#allocation5 + $0x5c] sm:$0xf] %vm37, %v1461
    %v1470 = vld [vmem:[#allocation5] sm:$0xff]
    %v1471 = vld [vmem:[#allocation5 + $0x8] sm:$0xf]
    %v1472 = vld [vmem:[#allocation5 + $0xc] sm:$0xff]
    %v1473 = vld [vmem:[#allocation5 + $0x14] sm:$0xf]
    %v1474 = vld [vmem:[#allocation5 + $0x18] sm:$0xff]
    %v1475 = vld [vmem:[#allocation5 + $0x20] sm:$0xf]
    %v1476 = vld [vmem:[#allocation5 + $0x24] sm:$0xff]
    %v1477 = vld [vmem:[#allocation5 + $0x2c] sm:$0xf]
    %v1478 = vld [vmem:[#allocation5 + $0x30] sm:$0xff]
    %v1479 = vld [vmem:[#allocation5 + $0x38] sm:$0xf]
    %v1480 = vld [vmem:[#allocation5 + $0x3c] sm:$0xff]
    %v1481 = vld [vmem:[#allocation5 + $0x44] sm:$0xf]
    %v1482 = vld [vmem:[#allocation5 + $0x48] sm:$0xff]
    %v1483 = vld [vmem:[#allocation5 + $0x50] sm:$0xf]
    %v1484 = vld [vmem:[#allocation5 + $0x54] sm:$0xff]
    %v1485 = vld [vmem:[#allocation5 + $0x5c] sm:$0xf]
    %v1486 = vld [vmem:[%s4] sm:$0xf]
    %v1487 = vld [vmem:[%s4 + $0x4] sm:$0xf]
    %v1488 = vld [vmem:[%s4 + $0x8] sm:$0xf]
    %v1489 = vld [vmem:[%s4 + $0xc] sm:$0xf]
    %v1490 = vld [vmem:[%s4 + $0x10] sm:$0xf]
    %v1491 = vld [vmem:[%s4 + $0x14] sm:$0xf]
    %v1492 = vld [vmem:[%s4 + $0x18] sm:$0xf]
    %v1493 = vld [vmem:[%s4 + $0x1c] sm:$0xf]
    %v1494 = vld [vmem:[%s4 + $0x20] sm:$0xf]
    %v1495 = vld [vmem:[%s4 + $0x24] sm:$0xf]
    %v1496 = vld [vmem:[%s4 + $0x28] sm:$0xf]
    %v1497 = vld [vmem:[%s4 + $0x2c] sm:$0xf]
    %v1498 = vld [vmem:[%s4 + $0x30] sm:$0xf]
    %v1499 = vld [vmem:[%s4 + $0x34] sm:$0xf]
    %v1500 = vld [vmem:[%s4 + $0x38] sm:$0xf]
    %v1501 = vld [vmem:[%s4 + $0x3c] sm:$0xf]
    %v1502 = vld [vmem:[%s4 + $0x40] sm:$0xf]
    %v1503 = vld [vmem:[%s4 + $0x44] sm:$0xf]
    %v1504 = vld [vmem:[%s4 + $0x48] sm:$0xf]
    %v1505 = vld [vmem:[%s4 + $0x4c] sm:$0xf]
    %v1506 = vld [vmem:[%s4 + $0x50] sm:$0xf]
    %v1507 = vld [vmem:[%s4 + $0x54] sm:$0xf]
    %v1508 = vld [vmem:[%s4 + $0x58] sm:$0xf]
    %v1509 = vld [vmem:[%s4 + $0x5c] sm:$0xf]
    %v1510 = vld [vmem:[%s4 + $0x60] sm:$0xf]
    %v1511 = vld [vmem:[%s4 + $0x64] sm:$0xf]
    %v1512 = vld [vmem:[%s4 + $0x68] sm:$0xf]
    %v1513 = vld [vmem:[%s4 + $0x6c] sm:$0xf]
    %v1514 = vld [vmem:[%s4 + $0x70] sm:$0xf]
    %v1515 = vld [vmem:[%s4 + $0x74] sm:$0xf]
    %v1516 = vld [vmem:[%s4 + $0x78] sm:$0xf]
    %v1517 = vld [vmem:[%s4 + $0x7c] sm:$0xf]
    %v1518 = vld [vmem:[%s4 + $0x80] sm:$0xf]
    %v1519 = vld [vmem:[%s4 + $0x84] sm:$0xf]
    %v1520 = vld [vmem:[%s4 + $0x88] sm:$0xf]
    %v1521 = vld [vmem:[%s4 + $0x8c] sm:$0xf]
    %v1530 = vcombine.high %v1470, %v1470
    %v1531 = vcombine.high %v1472, %v1472
    %v1532 = vcombine.high %v1474, %v1474
    %v1533 = vcombine.high %v1476, %v1476
    %v1534 = vcombine.high %v1478, %v1478
    %v1535 = vcombine.high %v1480, %v1480
    %v1536 = vcombine.high %v1482, %v1482
    %v1537 = vcombine.high %v1484, %v1484
    %v1546 = vpack.c.bf16 %v1470, %v1470
    %v1547 = vpack.c.bf16 %v1530, %v1530
    %v1548 = vpack.c.bf16 %v1471, %v1471
    %v1549 = vpack.c.bf16 %v1472, %v1472
    %v1550 = vpack.c.bf16 %v1531, %v1531
    %v1551 = vpack.c.bf16 %v1473, %v1473
    %v1552 = vpack.c.bf16 %v1474, %v1474
    %v1553 = vpack.c.bf16 %v1532, %v1532
    %v1554 = vpack.c.bf16 %v1475, %v1475
    %v1555 = vpack.c.bf16 %v1476, %v1476
    %v1556 = vpack.c.bf16 %v1533, %v1533
    %v1557 = vpack.c.bf16 %v1477, %v1477
    %v1558 = vpack.c.bf16 %v1478, %v1478
    %v1559 = vpack.c.bf16 %v1534, %v1534
    %v1560 = vpack.c.bf16 %v1479, %v1479
    %v1561 = vpack.c.bf16 %v1480, %v1480
    %v1562 = vpack.c.bf16 %v1535, %v1535
    %v1563 = vpack.c.bf16 %v1481, %v1481
    %v1564 = vpack.c.bf16 %v1482, %v1482
    %v1565 = vpack.c.bf16 %v1536, %v1536
    %v1566 = vpack.c.bf16 %v1483, %v1483
    %v1567 = vpack.c.bf16 %v1484, %v1484
    %v1568 = vpack.c.bf16 %v1537, %v1537
    %v1569 = vpack.c.bf16 %v1485, %v1485
    %v1594 = vcombine.low %v1546, %v1547
    %v1596 = vunpack.c.l.s4 1983009808
    %v1597 = vunpack.c.0.s8 %v1596
    %v1598 = vlaneseq
    %v1599 = vshrl.u32 %v1598, 7
    %v1600 = vsub.s32 %v1597, %v1599
    %v1601 = vrot.slane %v1594, %v1600
    %v1603 = vunpack.c.l.s4 1983009808
    %v1604 = vunpack.c.0.s8 %v1603
    %v1605 = vlaneseq
    %v1606 = vshrl.u32 %v1605, 7
    %v1607 = vsub.s32 %v1604, %v1606
    %v1608 = vrot.slane %v1548, %v1607
    %v1609 = vcombine.low %v1601, %v1608
    %v1610 = vcombine.low %v1549, %v1550
    %v1612 = vunpack.c.l.s4 1983009808
    %v1613 = vunpack.c.0.s8 %v1612
    %v1614 = vlaneseq
    %v1615 = vshrl.u32 %v1614, 7
    %v1616 = vsub.s32 %v1613, %v1615
    %v1617 = vrot.slane %v1610, %v1616
    %v1619 = vunpack.c.l.s4 1983009808
    %v1620 = vunpack.c.0.s8 %v1619
    %v1621 = vlaneseq
    %v1622 = vshrl.u32 %v1621, 7
    %v1623 = vsub.s32 %v1620, %v1622
    %v1624 = vrot.slane %v1551, %v1623
    %v1625 = vcombine.low %v1617, %v1624
    %v1626 = vcombine.low %v1552, %v1553
    %v1628 = vunpack.c.l.s4 1983009808
    %v1629 = vunpack.c.0.s8 %v1628
    %v1630 = vlaneseq
    %v1631 = vshrl.u32 %v1630, 7
    %v1632 = vsub.s32 %v1629, %v1631
    %v1633 = vrot.slane %v1626, %v1632
    %v1635 = vunpack.c.l.s4 1983009808
    %v1636 = vunpack.c.0.s8 %v1635
    %v1637 = vlaneseq
    %v1638 = vshrl.u32 %v1637, 7
    %v1639 = vsub.s32 %v1636, %v1638
    %v1640 = vrot.slane %v1554, %v1639
    %v1641 = vcombine.low %v1633, %v1640
    %v1642 = vcombine.low %v1555, %v1556
    %v1644 = vunpack.c.l.s4 1983009808
    %v1645 = vunpack.c.0.s8 %v1644
    %v1646 = vlaneseq
    %v1647 = vshrl.u32 %v1646, 7
    %v1648 = vsub.s32 %v1645, %v1647
    %v1649 = vrot.slane %v1642, %v1648
    %v1651 = vunpack.c.l.s4 1983009808
    %v1652 = vunpack.c.0.s8 %v1651
    %v1653 = vlaneseq
    %v1654 = vshrl.u32 %v1653, 7
    %v1655 = vsub.s32 %v1652, %v1654
    %v1656 = vrot.slane %v1557, %v1655
    %v1657 = vcombine.low %v1649, %v1656
    %v1658 = vcombine.low %v1558, %v1559
    %v1660 = vunpack.c.l.s4 1983009808
    %v1661 = vunpack.c.0.s8 %v1660
    %v1662 = vlaneseq
    %v1663 = vshrl.u32 %v1662, 7
    %v1664 = vsub.s32 %v1661, %v1663
    %v1665 = vrot.slane %v1658, %v1664
    %v1667 = vunpack.c.l.s4 1983009808
    %v1668 = vunpack.c.0.s8 %v1667
    %v1669 = vlaneseq
    %v1670 = vshrl.u32 %v1669, 7
    %v1671 = vsub.s32 %v1668, %v1670
    %v1672 = vrot.slane %v1560, %v1671
    %v1673 = vcombine.low %v1665, %v1672
    %v1674 = vcombine.low %v1561, %v1562
    %v1676 = vunpack.c.l.s4 1983009808
    %v1677 = vunpack.c.0.s8 %v1676
    %v1678 = vlaneseq
    %v1679 = vshrl.u32 %v1678, 7
    %v1680 = vsub.s32 %v1677, %v1679
    %v1681 = vrot.slane %v1674, %v1680
    %v1683 = vunpack.c.l.s4 1983009808
    %v1684 = vunpack.c.0.s8 %v1683
    %v1685 = vlaneseq
    %v1686 = vshrl.u32 %v1685, 7
    %v1687 = vsub.s32 %v1684, %v1686
    %v1688 = vrot.slane %v1563, %v1687
    %v1689 = vcombine.low %v1681, %v1688
    %v1690 = vcombine.low %v1564, %v1565
    %v1692 = vunpack.c.l.s4 1983009808
    %v1693 = vunpack.c.0.s8 %v1692
    %v1694 = vlaneseq
    %v1695 = vshrl.u32 %v1694, 7
    %v1696 = vsub.s32 %v1693, %v1695
    %v1697 = vrot.slane %v1690, %v1696
    %v1699 = vunpack.c.l.s4 1983009808
    %v1700 = vunpack.c.0.s8 %v1699
    %v1701 = vlaneseq
    %v1702 = vshrl.u32 %v1701, 7
    %v1703 = vsub.s32 %v1700, %v1702
    %v1704 = vrot.slane %v1566, %v1703
    %v1705 = vcombine.low %v1697, %v1704
    %v1706 = vcombine.low %v1567, %v1568
    %v1708 = vunpack.c.l.s4 1983009808
    %v1709 = vunpack.c.0.s8 %v1708
    %v1710 = vlaneseq
    %v1711 = vshrl.u32 %v1710, 7
    %v1712 = vsub.s32 %v1709, %v1711
    %v1713 = vrot.slane %v1706, %v1712
    %v1715 = vunpack.c.l.s4 1983009808
    %v1716 = vunpack.c.0.s8 %v1715
    %v1717 = vlaneseq
    %v1718 = vshrl.u32 %v1717, 7
    %v1719 = vsub.s32 %v1716, %v1718
    %v1720 = vrot.slane %v1569, %v1719
    %v1721 = vcombine.low %v1713, %v1720
    %v1722 = vcombine.low %v1609, %v1625
    %v1723 = vcombine.high %v1609, %v1625
    %v1724 = vcombine.low %v1641, %v1657
    %v1725 = vcombine.high %v1641, %v1657
    %v1727 = vunpack.c.l.s4 1983009808
    %v1728 = vunpack.c.0.s8 %v1727
    %v1729 = vlaneseq
    %v1730 = vshrl.u32 %v1729, 7
    %v1731 = vsub.s32 %v1728, %v1730
    %v1732 = vrot.slane %v1722, %v1731
    %v1734 = vunpack.c.l.s4 1983009808
    %v1735 = vunpack.c.0.s8 %v1734
    %v1736 = vlaneseq
    %v1737 = vshrl.u32 %v1736, 7
    %v1738 = vsub.s32 %v1735, %v1737
    %v1739 = vrot.slane %v1723, %v1738
    %v1741 = vunpack.c.l.s4 1983009808
    %v1742 = vunpack.c.0.s8 %v1741
    %v1743 = vlaneseq
    %v1744 = vshrl.u32 %v1743, 7
    %v1745 = vsub.s32 %v1742, %v1744
    %v1746 = vrot.slane %v1724, %v1745
    %v1748 = vunpack.c.l.s4 1983009808
    %v1749 = vunpack.c.0.s8 %v1748
    %v1750 = vlaneseq
    %v1751 = vshrl.u32 %v1750, 7
    %v1752 = vsub.s32 %v1749, %v1751
    %v1753 = vrot.slane %v1725, %v1752
    %v1754 = vcombine.low %v1732, %v1746
    %v1755 = vcombine.high %v1732, %v1746
    %v1756 = vcombine.low %v1739, %v1753
    %v1757 = vcombine.low %v1673, %v1689
    %v1758 = vcombine.high %v1673, %v1689
    %v1759 = vcombine.low %v1705, %v1721
    %v1760 = vcombine.high %v1705, %v1721
    %v1762 = vunpack.c.l.s4 1983009808
    %v1763 = vunpack.c.0.s8 %v1762
    %v1764 = vlaneseq
    %v1765 = vshrl.u32 %v1764, 7
    %v1766 = vsub.s32 %v1763, %v1765
    %v1767 = vrot.slane %v1757, %v1766
    %v1769 = vunpack.c.l.s4 1983009808
    %v1770 = vunpack.c.0.s8 %v1769
    %v1771 = vlaneseq
    %v1772 = vshrl.u32 %v1771, 7
    %v1773 = vsub.s32 %v1770, %v1772
    %v1774 = vrot.slane %v1758, %v1773
    %v1776 = vunpack.c.l.s4 1983009808
    %v1777 = vunpack.c.0.s8 %v1776
    %v1778 = vlaneseq
    %v1779 = vshrl.u32 %v1778, 7
    %v1780 = vsub.s32 %v1777, %v1779
    %v1781 = vrot.slane %v1759, %v1780
    %v1783 = vunpack.c.l.s4 1983009808
    %v1784 = vunpack.c.0.s8 %v1783
    %v1785 = vlaneseq
    %v1786 = vshrl.u32 %v1785, 7
    %v1787 = vsub.s32 %v1784, %v1786
    %v1788 = vrot.slane %v1760, %v1787
    %v1789 = vcombine.low %v1767, %v1781
    %v1790 = vcombine.high %v1767, %v1781
    %v1791 = vcombine.low %v1774, %v1788
    %v1832 = vunpack.c.l.b16 %v1486
    %v1833 = vunpack.c.l.b16 %v1487
    %v1834 = vunpack.c.l.b16 %v1488
    %v1835 = vunpack.c.l.b16 %v1489
    %v1836 = vunpack.c.l.b16 %v1490
    %v1837 = vunpack.c.l.b16 %v1491
    %v1838 = vunpack.c.l.b16 %v1492
    %v1839 = vunpack.c.l.b16 %v1493
    %v1840 = vunpack.c.l.b16 %v1494
    %v1841 = vunpack.c.l.b16 %v1495
    %v1842 = vunpack.c.l.b16 %v1496
    %v1843 = vunpack.c.l.b16 %v1497
    %v1844 = vunpack.c.l.b16 %v1498
    %v1845 = vunpack.c.l.b16 %v1499
    %v1846 = vunpack.c.l.b16 %v1500
    %v1847 = vunpack.c.l.b16 %v1501
    %v1848 = vunpack.c.l.b16 %v1502
    %v1849 = vunpack.c.l.b16 %v1503
    %v1850 = vunpack.c.l.b16 %v1504
    %v1851 = vunpack.c.l.b16 %v1505
    %v1852 = vunpack.c.l.b16 %v1506
    %v1853 = vunpack.c.l.b16 %v1507
    %v1854 = vunpack.c.l.b16 %v1508
    %v1855 = vunpack.c.l.b16 %v1509
    %v1856 = vunpack.c.l.b16 %v1510
    %v1857 = vunpack.c.l.b16 %v1511
    %v1858 = vunpack.c.l.b16 %v1512
    %v1859 = vunpack.c.l.b16 %v1513
    %v1860 = vunpack.c.l.b16 %v1514
    %v1861 = vunpack.c.l.b16 %v1515
    %v1862 = vunpack.c.l.b16 %v1516
    %v1863 = vunpack.c.l.b16 %v1517
    %v1864 = vunpack.c.l.b16 %v1518
    %v1865 = vunpack.c.l.b16 %v1519
    %v1866 = vunpack.c.l.b16 %v1520
    %v1867 = vunpack.c.l.b16 %v1521
    %v1868 = vpack.c.b16 %v1833, %v1832
    %v1869 = vpack.c.b16 %v1835, %v1834
    %v1870 = vpack.c.b16 %v1837, %v1836
    %v1871 = vpack.c.b16 %v1839, %v1838
    %v1872 = vpack.c.b16 %v1841, %v1840
    %v1873 = vpack.c.b16 %v1843, %v1842
    %v1874 = vpack.c.b16 %v1845, %v1844
    %v1875 = vpack.c.b16 %v1847, %v1846
    %v1876 = vpack.c.b16 %v1849, %v1848
    %v1877 = vpack.c.b16 %v1851, %v1850
    %v1878 = vpack.c.b16 %v1853, %v1852
    %v1879 = vpack.c.b16 %v1855, %v1854
    %v1880 = vpack.c.b16 %v1857, %v1856
    %v1881 = vpack.c.b16 %v1859, %v1858
    %v1882 = vpack.c.b16 %v1861, %v1860
    %v1883 = vpack.c.b16 %v1863, %v1862
    %v1884 = vpack.c.b16 %v1865, %v1864
    %v1885 = vpack.c.b16 %v1867, %v1866
    %v1905 = vsel %vm864, %v1756, 0
    %v1908 = vsel %vm864, %v1791, 0
    %1910 = vmatprep.subr.bf16.mxu0 0
    %1911 = vmatpush1.bf16.msra.mxu0 %v1875
    %1912 = vmatprep.subr.bf16.mxu0 0
    %1913 = vmatpush1.bf16.msra.mxu0 %v1874
    %1914 = vmatprep.subr.bf16.mxu0 0
    %1915 = vmatpush1.bf16.msra.mxu0 %v1873
    %1916 = vmatprep.subr.bf16.mxu0 0
    %1917 = vmatpush1.bf16.msra.mxu0 %v1872
    %1918 = vmatprep.subr.bf16.mxu0 0
    %1919 = vmatpush1.bf16.msra.mxu0 %v1871
    %1920 = vmatprep.subr.bf16.mxu0 0
    %1921 = vmatpush1.bf16.msra.mxu0 %v1870
    %1922 = vmatprep.subr.bf16.mxu0 0
    %1923 = vmatpush1.bf16.msra.mxu0 %v1869
    %1924 = vmatprep.subr.bf16.mxu0 0
    %1925 = vmatpush1.bf16.msra.mxu0 %v1868
    %1926 = vmatprep.subr.bf16.mxu0 0
    %1927 = vmatpush2.bf16.msra.mxu0 %v1883
    %1928 = vmatprep.subr.bf16.mxu0 0
    %1929 = vmatpush2.bf16.msra.mxu0 %v1882
    %1930 = vmatprep.subr.bf16.mxu0 0
    %1931 = vmatpush2.bf16.msra.mxu0 %v1881
    %1932 = vmatprep.subr.bf16.mxu0 0
    %1933 = vmatpush2.bf16.msra.mxu0 %v1880
    %1934 = vmatprep.subr.bf16.mxu0 0
    %1935 = vmatpush2.bf16.msra.mxu0 %v1879
    %1936 = vmatprep.subr.bf16.mxu0 0
    %1937 = vmatpush2.bf16.msra.mxu0 %v1878
    %1938 = vmatprep.subr.bf16.mxu0 0
    %1939 = vmatpush2.bf16.msra.mxu0 %v1877
    %1940 = vmatprep.subr.bf16.mxu0 0
    %1941 = vmatpush2.bf16.msra.mxu0 %v1876
    %1942 = vmatprep.mubr.bf16.mxu0 %v1755
    %1943 = vmatmul.mubr.bf16.gmra.mxu0 %v1754
    %v1944 = vpop.f32.mrf.mxu0
    %v1945 = vadd.f32 0.0, %v1944
    %v1946 = vpop.f32.mrf.mxu0
    %v1947 = vpop.f32.mrf.mxu0
    %v1948 = vadd.f32 0.0, %v1947
    %v1949 = vpop.f32.mrf.mxu0
    %1950 = vmatprep.mubr.bf16.mxu0 %v1790
    %1951 = vmatmul.mubr.bf16.gmra.mxu0 %v1789
    %v1952 = vpop.f32.mrf.mxu0
    %v1953 = vadd.f32 0.0, %v1952
    %v1954 = vpop.f32.mrf.mxu0
    %v1955 = vpop.f32.mrf.mxu0
    %v1956 = vadd.f32 0.0, %v1955
    %v1957 = vpop.f32.mrf.mxu0
    %1958 = vdwg.mxu0
    %1959 = vmatprep.subr.bf16.mxu0 0
    %1960 = vmatpush1.bf16.msra.mxu0 0
    %1961 = vmatprep.subr.bf16.mxu0 0
    %1962 = vmatpush1.bf16.msra.mxu0 0
    %1963 = vmatprep.subr.bf16.mxu0 0
    %1964 = vmatpush1.bf16.msra.mxu0 0
    %1965 = vmatprep.subr.bf16.mxu0 0
    %1966 = vmatpush1.bf16.msra.mxu0 0
    %1967 = vmatprep.subr.bf16.mxu0 0
    %1968 = vmatpush1.bf16.msra.mxu0 0
    %1969 = vmatprep.subr.bf16.mxu0 0
    %1970 = vmatpush1.bf16.msra.mxu0 0
    %1971 = vmatprep.subr.bf16.mxu0 0
    %1972 = vmatpush1.bf16.msra.mxu0 %v1885
    %1973 = vmatprep.subr.bf16.mxu0 0
    %1974 = vmatpush1.bf16.msra.mxu0 %v1884
    %1975 = vmatprep.subr.bf16.mxu0 0
    %1976 = vmatpush2.bf16.msra.mxu0 0
    %1977 = vmatprep.subr.bf16.mxu0 0
    %1978 = vmatpush2.bf16.msra.mxu0 0
    %1979 = vmatprep.subr.bf16.mxu0 0
    %1980 = vmatpush2.bf16.msra.mxu0 0
    %1981 = vmatprep.subr.bf16.mxu0 0
    %1982 = vmatpush2.bf16.msra.mxu0 0
    %1983 = vmatprep.subr.bf16.mxu0 0
    %1984 = vmatpush2.bf16.msra.mxu0 0
    %1985 = vmatprep.subr.bf16.mxu0 0
    %1986 = vmatpush2.bf16.msra.mxu0 0
    %1987 = vmatprep.subr.bf16.mxu0 0
    %1988 = vmatpush2.bf16.msra.mxu0 0
    %1989 = vmatprep.subr.bf16.mxu0 0
    %1990 = vmatpush2.bf16.msra.mxu0 0
    %1991 = vmatprep.mubr.bf16.mxu0 0
    %1992 = vmatmul.mubr.bf16.gmra.mxu0 %v1905
    %v1993 = vpop.f32.mrf.mxu0
    %v1994 = vadd.f32 %v1945, %v1993
    %v1995 = vpop.f32.mrf.mxu0
    %v1996 = vpop.f32.mrf.mxu0
    %v1997 = vadd.f32 %v1948, %v1996
    %v1998 = vpop.f32.mrf.mxu0
    %1999 = vmatprep.mubr.bf16.mxu0 0
    %2000 = vmatmul.mubr.bf16.gmra.mxu0 %v1908
    %v2001 = vpop.f32.mrf.mxu0
    %v2002 = vadd.f32 %v1953, %v2001
    %v2003 = vpop.f32.mrf.mxu0
    %v2004 = vpop.f32.mrf.mxu0
    %v2005 = vadd.f32 %v1956, %v2004
    %v2006 = vpop.f32.mrf.mxu0
    %2007 = vdwg.mxu0
    %v2012 = vcombine.high %v1994, %v1994
    %v2013 = vcombine.high %v1997, %v1997
    %v2014 = vcombine.high %v2002, %v2002
    %v2015 = vcombine.high %v2005, %v2005
    %v2020 = vld [vmem:[%s5] sm:$0x1]
    %v2021 = vld [vmem:[%s6] sm:$0x1]
    %v2022 = vsel %vm37, %v1994, 0.0
    %v2023 = vsel %vm37, %v2012, 0.0
    %v2024 = vadd.f32 %v2022, %v2023
    %v2025 = vsel %vm37, %v1997, 0.0
    %v2026 = vadd.f32 %v2024, %v2025
    %v2027 = vsel %vm37, %v2013, 0.0
    %v2028 = vadd.f32 %v2026, %v2027
    %v2029 = vsel %vm37, %v2002, 0.0
    %v2030 = vadd.f32 %v2028, %v2029
    %v2031 = vsel %vm37, %v2014, 0.0
    %v2032 = vadd.f32 %v2030, %v2031
    %v2033 = vsel %vm37, %v2005, 0.0
    %v2034 = vadd.f32 %v2032, %v2033
    %v2035 = vsel %vm37, %v2015, 0.0
    %v2036 = vadd.f32 %v2034, %v2035
    %v2037 = vrot.slane %v2036, 4
    %v2038 = vadd.f32 %v2036, %v2037
    %v2039 = vrot.slane %v2038, 2
    %v2040 = vadd.f32 %v2038, %v2039
    %v2041 = vrot.slane %v2040, 1
    %v2042 = vadd.f32 %v2040, %v2041
    %v2043 = vmul.f32 %v1994, %v1994
    %v2044 = vmul.f32 %v2012, %v2012
    %v2045 = vmul.f32 %v1997, %v1997
    %v2046 = vmul.f32 %v2013, %v2013
    %v2047 = vmul.f32 %v2002, %v2002
    %v2048 = vmul.f32 %v2014, %v2014
    %v2049 = vmul.f32 %v2005, %v2005
    %v2050 = vmul.f32 %v2015, %v2015
    %v2051 = vsel %vm37, %v2043, 0.0
    %v2052 = vsel %vm37, %v2044, 0.0
    %v2053 = vadd.f32 %v2051, %v2052
    %v2054 = vsel %vm37, %v2045, 0.0
    %v2055 = vadd.f32 %v2053, %v2054
    %v2056 = vsel %vm37, %v2046, 0.0
    %v2057 = vadd.f32 %v2055, %v2056
    %v2058 = vsel %vm37, %v2047, 0.0
    %v2059 = vadd.f32 %v2057, %v2058
    %v2060 = vsel %vm37, %v2048, 0.0
    %v2061 = vadd.f32 %v2059, %v2060
    %v2062 = vsel %vm37, %v2049, 0.0
    %v2063 = vadd.f32 %v2061, %v2062
    %v2064 = vsel %vm37, %v2050, 0.0
    %v2065 = vadd.f32 %v2063, %v2064
    %v2066 = vrot.slane %v2065, 4
    %v2067 = vadd.f32 %v2065, %v2066
    %v2068 = vrot.slane %v2067, 2
    %v2069 = vadd.f32 %v2067, %v2068
    %v2070 = vrot.slane %v2069, 1
    %v2071 = vadd.f32 %v2069, %v2070
    %v2072 = vmul.f32 %v2042, 0.03125
    %v2073 = vmul.f32 %v2071, 0.03125
    %v2074 = vmul.f32 %v2072, %v2072
    %v2075 = vsub.f32 %v2073, %v2074
    %v2076 = vadd.f32 %v2075, 1e-05
    %v2077 = vrsqrt.pop %v2076
    %v2078 = vsub.f32 %v1994, %v2072
    %v2079 = vsub.f32 %v2012, %v2072
    %v2080 = vsub.f32 %v1997, %v2072
    %v2081 = vsub.f32 %v2013, %v2072
    %v2082 = vsub.f32 %v2002, %v2072
    %v2083 = vsub.f32 %v2014, %v2072
    %v2084 = vsub.f32 %v2005, %v2072
    %v2085 = vsub.f32 %v2015, %v2072
    %v2086 = vmul.f32 %v2077, %v2020
    %v2087 = vlaneseq
    %v2088 = vshrl.u32 %v2087, 7
    %v2089 = vsub.s32 0, %v2088
    %v2090 = vrot.slane %v2086, %v2089
    %v2091 = vmul.f32 %v2078, %v2090
    %v2092 = vmul.f32 %v2079, %v2090
    %v2093 = vmul.f32 %v2080, %v2090
    %v2094 = vmul.f32 %v2081, %v2090
    %v2095 = vmul.f32 %v2082, %v2090
    %v2096 = vmul.f32 %v2083, %v2090
    %v2097 = vmul.f32 %v2084, %v2090
    %v2098 = vmul.f32 %v2085, %v2090
    %v2100 = vlaneseq
    %v2101 = vshrl.u32 %v2100, 7
    %v2102 = vsub.s32 0, %v2101
    %v2103 = vrot.slane %v2021, %v2102
    %v2105 = vadd.f32 %v2091, %v2103
    %v2106 = vadd.f32 %v2092, %v2103
    %v2107 = vadd.f32 %v2093, %v2103
    %v2108 = vadd.f32 %v2094, %v2103
    %v2109 = vadd.f32 %v2095, %v2103
    %v2110 = vadd.f32 %v2096, %v2103
    %v2111 = vadd.f32 %v2097, %v2103
    %v2112 = vadd.f32 %v2098, %v2103
    %v2113 = vadd.f32 %v2105, %v28
    %v2114 = vadd.f32 %v2106, %v29
    %v2115 = vadd.f32 %v2107, %v30
    %v2116 = vadd.f32 %v2108, %v31
    %v2117 = vadd.f32 %v2109, %v32
    %v2118 = vadd.f32 %v2110, %v33
    %v2119 = vadd.f32 %v2111, %v34
    %v2120 = vadd.f32 %v2112, %v35
    %v2121 = vmax.f32 %v2113, 0.0
    %v2122 = vmax.f32 %v2114, 0.0
    %v2123 = vmax.f32 %v2115, 0.0
    %v2124 = vmax.f32 %v2116, 0.0
    %v2125 = vmax.f32 %v2117, 0.0
    %v2126 = vmax.f32 %v2118, 0.0
    %v2127 = vmax.f32 %v2119, 0.0
    %v2128 = vmax.f32 %v2120, 0.0
    %2129 = vst.msk [vmem:[#allocation6] sm:$0xf] %vm37, %v2121
    %2130 = vst.msk [vmem:[#allocation6 + $0x4] sm:$0xf] %vm37, %v2122
    %2131 = vst.msk [vmem:[#allocation6 + $0x8] sm:$0xf] %vm37, %v2123
    %2132 = vst.msk [vmem:[#allocation6 + $0xc] sm:$0xf] %vm37, %v2124
    %2133 = vst.msk [vmem:[#allocation6 + $0x10] sm:$0xf] %vm37, %v2125
    %2134 = vst.msk [vmem:[#allocation6 + $0x14] sm:$0xf] %vm37, %v2126
    %2135 = vst.msk [vmem:[#allocation6 + $0x18] sm:$0xf] %vm37, %v2127
    %2136 = vst.msk [vmem:[#allocation6 + $0x1c] sm:$0xf] %vm37, %v2128
    // Predicated region
    $region30: #{tpu_custom_call.1} parent=1 // pred_check
      _
    $region31: #{tpu_custom_call.1} parent=1 // pred_check_branch
      %2138 = sbr.rel (0) target = $region33
    $region32: #{tpu_custom_call.1} parent=1 // pred_region
      %s2140 = ssub.s32 512, 512
      %2141 = vsyncadd [#allocation7], %s2140
      %s2142 = sshll.u32 [#allocation6], 4
      %s2143 = int_to_ptr.vmem [resolvable:$true] %s2142
      %2148 = dma.vmem_to_hbm [thread:$0]  %s2143, 512, %s7, [#allocation7], 64, 64, 4
    $region33: #{tpu_custom_call.1} parent=1 // pred_fallthru
      _
    // Predicated region
    $region34: #{tpu_custom_call.1} parent=1 // pred_check
      _
    $region35: #{tpu_custom_call.1} parent=1 // pred_check_branch
      %2150 = sbr.rel (0) target = $region37
    $region36: #{tpu_custom_call.1} parent=1 // pred_region
      %2151 = dma.done [#allocation7], 512
    $region37: #{tpu_custom_call.1} parent=1 // pred_fallthru
      _
    %2152 = vsyncpa [#allocation7], 1

</llo_original>
